<compile_context>
chip_gen: v7x
topology: tpu7x:2x2x1
jax: 0.10.0
libtpu: 0.0.40
codegen_flags: <defaults>
</compile_context>

<pallas_src>
import jax
import jax.numpy as jnp
from jax.experimental import pallas as pl
from jax.experimental.pallas import tpu as pltpu


# --------------------------- Fused whole-model kernel --------------------------
def _make_fused_lstm_kernel(num_layers, hidden_size, seq_len, batch):
    H = hidden_size
    T = seq_len
    B = batch

    def kernel(x_ref, *refs):
        # refs layout: [wih_0, whh_0, b_0, ..., wih_{L-1}, whh_{L-1}, b_{L-1},
        #               w_out, b_out, out_ref]
        w_refs = refs[:3 * num_layers]
        wout_ref, bout_ref, out_ref = refs[3 * num_layers:]

        x_tb = x_ref[...]                          # (T*B, D), t-major rows

        # Load weights once (values stay resident in vregs / VMEM).
        wih = [w_refs[3 * l][...] for l in range(num_layers)]      # (D_in, 4H)
        whh = [w_refs[3 * l + 1][...] for l in range(num_layers)]  # (H, 4H)
        bias = [w_refs[3 * l + 2][...] for l in range(num_layers)] # (1, 4H)

        # Layer-0 input projection, batched over all timesteps: one matmul,
        # fully independent of the recurrence (free MXU filler).
        gx0 = jnp.dot(x_tb, wih[0],
                      preferred_element_type=jnp.float32) + bias[0]  # (T*B, 4H)

        h = [jnp.zeros((B, H), jnp.float32) for _ in range(num_layers)]
        c = [jnp.zeros((B, H), jnp.float32) for _ in range(num_layers)]

        # Wavefront over timesteps: layer l at step t runs as soon as layer
        # l-1 at step t is done -> critical path ~ (T + num_layers) steps.
        for t in range(T):
            inp = None
            for l in range(num_layers):
                if l == 0:
                    g_in = gx0[t * B:(t + 1) * B, :]          # static 2-row slice
                else:
                    g_in = jnp.dot(inp, wih[l],
                                   preferred_element_type=jnp.float32) + bias[l]
                gates = g_in + jnp.dot(h[l], whh[l],
                                       preferred_element_type=jnp.float32)
                # Gate column order (set up by the wrapper): i, f, o, g.
                sig = jax.nn.sigmoid(gates[:, :3 * H])        # one EUP slab
                g_g = jnp.tanh(gates[:, 3 * H:])
                i_g = sig[:, 0 * H:1 * H]
                f_g = sig[:, 1 * H:2 * H]
                o_g = sig[:, 2 * H:3 * H]
                c[l] = f_g * c[l] + i_g * g_g
                h[l] = o_g * jnp.tanh(c[l])
                inp = h[l]

        # Linear head on the last timestep's hidden state of the top layer.
        out_ref[...] = (
            jnp.dot(h[-1], wout_ref[...], preferred_element_type=jnp.float32)
            + bout_ref[...]
        ).astype(out_ref.dtype)

    return kernel


def _reorder_gates(w, H):
    """PyTorch packs gate rows as (i, f, g, o); reorder to (i, f, o, g)."""
    i, f, g, o = w[:H], w[H:2 * H], w[2 * H:3 * H], w[3 * H:4 * H]
    return jnp.concatenate([i, f, o, g], axis=0)


def lstm_model(X, params):
    """Matches LSTM.forward: zero-initialized (h0, c0), multi-layer LSTM
    (batch_first), then Linear on the last timestep's hidden state."""
    B, T, D = X.shape
    layers = params["lstm"]
    num_layers = len(layers)
    H = layers[0][1].shape[1]
    C = params["w_out"].shape[0]

    # Layout plumbing (tiny one-off XLA work): t-major input slab + gate
    # reordering + transposed weights + fused biases.
    x_tb = jnp.swapaxes(X, 0, 1).reshape(T * B, D)      # (T*B, D), t-major

    flat_inputs = [x_tb]
    for (w_ih, w_hh, b_ih, b_hh) in layers:
        flat_inputs += [
            _reorder_gates(w_ih, H).T,                       # (D_in, 4H)
            _reorder_gates(w_hh, H).T,                       # (H, 4H)
            _reorder_gates(b_ih + b_hh, H).reshape(1, 4 * H) # (1, 4H)
        ]
    flat_inputs += [params["w_out"].T, params["b_out"].reshape(1, C)]

    return pl.pallas_call(
        _make_fused_lstm_kernel(num_layers, H, T, B),
        out_shape=jax.ShapeDtypeStruct((B, C), X.dtype),
        in_specs=[pl.BlockSpec(memory_space=pltpu.MemorySpace.VMEM)
                  for _ in flat_inputs],
        out_specs=pl.BlockSpec(memory_space=pltpu.MemorySpace.VMEM),
    )(*flat_inputs)


# ------------------------------ Pure-JAX reference ----------------------------
def lstm_model_ref(X, params):
    B = X.shape[0]
    x = jnp.transpose(X, (1, 0, 2))  # (T, B, D)
    for (w_ih, w_hh, b_ih, b_hh) in params["lstm"]:
        H = w_hh.shape[1]

        def step(carry, x_t):
            h, c = carry
            gates = x_t @ w_ih.T + h @ w_hh.T + b_ih + b_hh
            i = jax.nn.sigmoid(gates[:, :H])
            f = jax.nn.sigmoid(gates[:, H:2 * H])
            g = jnp.tanh(gates[:, 2 * H:3 * H])
            o = jax.nn.sigmoid(gates[:, 3 * H:])
            c = f * c + i * g
            h = o * jnp.tanh(c)
            return (h, c), h

        init = (jnp.zeros((B, H), jnp.float32), jnp.zeros((B, H), jnp.float32))
        _, x = jax.lax.scan(step, init, x)
    return x[-1] @ params["w_out"].T + params["b_out"]


# ------------------------------ Parameter init --------------------------------
def init_params(key, input_len, hidden_size, num_layers, num_classes):
    """Deterministic init mimicking PyTorch's uniform(-1/sqrt(H), 1/sqrt(H))."""
    params = {"lstm": []}
    k = 1.0 / jnp.sqrt(hidden_size)
    d_in = input_len
    for _ in range(num_layers):
        key, k1, k2, k3, k4 = jax.random.split(key, 5)
        w_ih = jax.random.uniform(k1, (4 * hidden_size, d_in), jnp.float32, -k, k)
        w_hh = jax.random.uniform(k2, (4 * hidden_size, hidden_size), jnp.float32, -k, k)
        b_ih = jax.random.uniform(k3, (4 * hidden_size,), jnp.float32, -k, k)
        b_hh = jax.random.uniform(k4, (4 * hidden_size,), jnp.float32, -k, k)
        params["lstm"].append((w_ih, w_hh, b_ih, b_hh))
        d_in = hidden_size
    key, k5, k6 = jax.random.split(key, 3)
    kl = 1.0 / jnp.sqrt(hidden_size)
    params["w_out"] = jax.random.uniform(k5, (num_classes, hidden_size), jnp.float32, -kl, kl)
    params["b_out"] = jax.random.uniform(k6, (num_classes,), jnp.float32, -kl, kl)
    return params


# ----------------------------------- Main -------------------------------------
if __name__ == "__main__":
    B, T, INPUT_LEN = 2, 8, 16
    HIDDEN, NUM_LAYERS, NUM_CLASSES = 32, 2, 1

    key = jax.random.PRNGKey(0)
    key, kx = jax.random.split(key)
    X = jax.random.normal(kx, (B, T, INPUT_LEN), jnp.float32)
    params = init_params(key, INPUT_LEN, HIDDEN, NUM_LAYERS, NUM_CLASSES)

    fused = jax.jit(lstm_model)
    out = jax.block_until_ready(fused(X, params))
    assert out.shape == (B, NUM_CLASSES), out.shape

    ref = jax.block_until_ready(lstm_model_ref(X, params))
    assert jnp.allclose(out, ref, rtol=1e-4, atol=1e-5), (out, ref)

    print("KERNEL_OK")
</pallas_src>

<mosaic_0001>
module attributes {stable_mosaic.version = 11 : i64} {
  func.func @kernel(%arg0: memref<16x16xf32, #tpu.memory_space<vmem>>, %arg1: memref<16x128xf32, #tpu.memory_space<vmem>>, %arg2: memref<32x128xf32, #tpu.memory_space<vmem>>, %arg3: memref<1x128xf32, #tpu.memory_space<vmem>>, %arg4: memref<32x128xf32, #tpu.memory_space<vmem>>, %arg5: memref<32x128xf32, #tpu.memory_space<vmem>>, %arg6: memref<1x128xf32, #tpu.memory_space<vmem>>, %arg7: memref<32x1xf32, #tpu.memory_space<vmem>>, %arg8: memref<1x1xf32, #tpu.memory_space<vmem>>, %arg9: memref<2x1xf32, #tpu.memory_space<vmem>>) attributes {dimension_semantics = [], scalar_prefetch = 0 : i64, scratch_operands = 0 : i64, tpu.core_type = #tpu.core_type<tc>} {
    %c0 = arith.constant 0 : index
    %c0_0 = arith.constant 0 : index
    %0 = vector.load %arg0[%c0, %c0_0] : memref<16x16xf32, #tpu.memory_space<vmem>>, vector<16x16xf32>
    %c0_1 = arith.constant 0 : index
    %c0_2 = arith.constant 0 : index
    %1 = vector.load %arg1[%c0_1, %c0_2] : memref<16x128xf32, #tpu.memory_space<vmem>>, vector<16x128xf32>
    %c0_3 = arith.constant 0 : index
    %c0_4 = arith.constant 0 : index
    %2 = vector.load %arg4[%c0_3, %c0_4] : memref<32x128xf32, #tpu.memory_space<vmem>>, vector<32x128xf32>
    %c0_5 = arith.constant 0 : index
    %c0_6 = arith.constant 0 : index
    %3 = vector.load %arg2[%c0_5, %c0_6] : memref<32x128xf32, #tpu.memory_space<vmem>>, vector<32x128xf32>
    %c0_7 = arith.constant 0 : index
    %c0_8 = arith.constant 0 : index
    %4 = vector.load %arg5[%c0_7, %c0_8] : memref<32x128xf32, #tpu.memory_space<vmem>>, vector<32x128xf32>
    %c0_9 = arith.constant 0 : index
    %c0_10 = arith.constant 0 : index
    %5 = vector.load %arg3[%c0_9, %c0_10] : memref<1x128xf32, #tpu.memory_space<vmem>>, vector<1x128xf32>
    %c0_11 = arith.constant 0 : index
    %c0_12 = arith.constant 0 : index
    %6 = vector.load %arg6[%c0_11, %c0_12] : memref<1x128xf32, #tpu.memory_space<vmem>>, vector<1x128xf32>
    %cst = arith.constant dense<0.000000e+00> : vector<16x128xf32>
    %7 = tpu.matmul %0, %1, %cst {dimension_numbers = #tpu.dot_dimension_numbers<[1], [0], [0], [1], [0, 0, 1, 1], [], []>} : vector<16x16xf32>, vector<16x128xf32>, vector<16x128xf32> -> vector<16x128xf32>
    %8 = vector.broadcast %5 : vector<1x128xf32> to vector<16x128xf32>
    %9 = arith.addf %7, %8 : vector<16x128xf32>
    %cst_13 = arith.constant 0.000000e+00 : f32
    %10 = vector.broadcast %cst_13 : f32 to vector<2x32xf32>
    %cst_14 = arith.constant 0.000000e+00 : f32
    %11 = vector.broadcast %cst_14 : f32 to vector<2x32xf32>
    %cst_15 = arith.constant 0.000000e+00 : f32
    %12 = vector.broadcast %cst_15 : f32 to vector<2x32xf32>
    %cst_16 = arith.constant 0.000000e+00 : f32
    %13 = vector.broadcast %cst_16 : f32 to vector<2x32xf32>
    %14 = vector.extract_strided_slice %9 {offsets = [0, 0], sizes = [2, 128], strides = [1, 1]} : vector<16x128xf32> to vector<2x128xf32>
    %cst_17 = arith.constant dense<0.000000e+00> : vector<2x128xf32>
    %15 = tpu.matmul %10, %3, %cst_17 {dimension_numbers = #tpu.dot_dimension_numbers<[1], [0], [0], [1], [0, 0, 1, 1], [], []>} : vector<2x32xf32>, vector<32x128xf32>, vector<2x128xf32> -> vector<2x128xf32>
    %16 = arith.addf %14, %15 : vector<2x128xf32>
    %17 = vector.extract_strided_slice %16 {offsets = [0, 0], sizes = [2, 96], strides = [1, 1]} : vector<2x128xf32> to vector<2x96xf32>
    %18 = arith.negf %17 : vector<2x96xf32>
    %19 = math.exp %18 : vector<2x96xf32>
    %cst_18 = arith.constant 1.000000e+00 : f32
    %20 = vector.broadcast %cst_18 : f32 to vector<2x96xf32>
    %21 = arith.addf %20, %19 : vector<2x96xf32>
    %22 = arith.divf %20, %21 : vector<2x96xf32>
    %23 = vector.extract_strided_slice %16 {offsets = [0, 96], sizes = [2, 32], strides = [1, 1]} : vector<2x128xf32> to vector<2x32xf32>
    %24 = math.tanh %23 : vector<2x32xf32>
    %25 = vector.extract_strided_slice %22 {offsets = [0, 0], sizes = [2, 32], strides = [1, 1]} : vector<2x96xf32> to vector<2x32xf32>
    %26 = vector.extract_strided_slice %22 {offsets = [0, 32], sizes = [2, 32], strides = [1, 1]} : vector<2x96xf32> to vector<2x32xf32>
    %27 = vector.extract_strided_slice %22 {offsets = [0, 64], sizes = [2, 32], strides = [1, 1]} : vector<2x96xf32> to vector<2x32xf32>
    %28 = arith.mulf %26, %12 : vector<2x32xf32>
    %29 = arith.mulf %25, %24 : vector<2x32xf32>
    %30 = arith.addf %28, %29 : vector<2x32xf32>
    %31 = math.tanh %30 : vector<2x32xf32>
    %32 = arith.mulf %27, %31 : vector<2x32xf32>
    %cst_19 = arith.constant dense<0.000000e+00> : vector<2x128xf32>
    %33 = tpu.matmul %32, %2, %cst_19 {dimension_numbers = #tpu.dot_dimension_numbers<[1], [0], [0], [1], [0, 0, 1, 1], [], []>} : vector<2x32xf32>, vector<32x128xf32>, vector<2x128xf32> -> vector<2x128xf32>
    %34 = vector.broadcast %6 : vector<1x128xf32> to vector<2x128xf32>
    %35 = arith.addf %33, %34 : vector<2x128xf32>
    %cst_20 = arith.constant dense<0.000000e+00> : vector<2x128xf32>
    %36 = tpu.matmul %11, %4, %cst_20 {dimension_numbers = #tpu.dot_dimension_numbers<[1], [0], [0], [1], [0, 0, 1, 1], [], []>} : vector<2x32xf32>, vector<32x128xf32>, vector<2x128xf32> -> vector<2x128xf32>
    %37 = arith.addf %35, %36 : vector<2x128xf32>
    %38 = vector.extract_strided_slice %37 {offsets = [0, 0], sizes = [2, 96], strides = [1, 1]} : vector<2x128xf32> to vector<2x96xf32>
    %39 = arith.negf %38 : vector<2x96xf32>
    %40 = math.exp %39 : vector<2x96xf32>
    %cst_21 = arith.constant 1.000000e+00 : f32
    %41 = vector.broadcast %cst_21 : f32 to vector<2x96xf32>
    %42 = arith.addf %41, %40 : vector<2x96xf32>
    %43 = arith.divf %41, %42 : vector<2x96xf32>
    %44 = vector.extract_strided_slice %37 {offsets = [0, 96], sizes = [2, 32], strides = [1, 1]} : vector<2x128xf32> to vector<2x32xf32>
    %45 = math.tanh %44 : vector<2x32xf32>
    %46 = vector.extract_strided_slice %43 {offsets = [0, 0], sizes = [2, 32], strides = [1, 1]} : vector<2x96xf32> to vector<2x32xf32>
    %47 = vector.extract_strided_slice %43 {offsets = [0, 32], sizes = [2, 32], strides = [1, 1]} : vector<2x96xf32> to vector<2x32xf32>
    %48 = vector.extract_strided_slice %43 {offsets = [0, 64], sizes = [2, 32], strides = [1, 1]} : vector<2x96xf32> to vector<2x32xf32>
    %49 = arith.mulf %47, %13 : vector<2x32xf32>
    %50 = arith.mulf %46, %45 : vector<2x32xf32>
    %51 = arith.addf %49, %50 : vector<2x32xf32>
    %52 = math.tanh %51 : vector<2x32xf32>
    %53 = arith.mulf %48, %52 : vector<2x32xf32>
    %54 = vector.extract_strided_slice %9 {offsets = [2, 0], sizes = [2, 128], strides = [1, 1]} : vector<16x128xf32> to vector<2x128xf32>
    %cst_22 = arith.constant dense<0.000000e+00> : vector<2x128xf32>
    %55 = tpu.matmul %32, %3, %cst_22 {dimension_numbers = #tpu.dot_dimension_numbers<[1], [0], [0], [1], [0, 0, 1, 1], [], []>} : vector<2x32xf32>, vector<32x128xf32>, vector<2x128xf32> -> vector<2x128xf32>
    %56 = arith.addf %54, %55 : vector<2x128xf32>
    %57 = vector.extract_strided_slice %56 {offsets = [0, 0], sizes = [2, 96], strides = [1, 1]} : vector<2x128xf32> to vector<2x96xf32>
    %58 = arith.negf %57 : vector<2x96xf32>
    %59 = math.exp %58 : vector<2x96xf32>
    %cst_23 = arith.constant 1.000000e+00 : f32
    %60 = vector.broadcast %cst_23 : f32 to vector<2x96xf32>
    %61 = arith.addf %60, %59 : vector<2x96xf32>
    %62 = arith.divf %60, %61 : vector<2x96xf32>
    %63 = vector.extract_strided_slice %56 {offsets = [0, 96], sizes = [2, 32], strides = [1, 1]} : vector<2x128xf32> to vector<2x32xf32>
    %64 = math.tanh %63 : vector<2x32xf32>
    %65 = vector.extract_strided_slice %62 {offsets = [0, 0], sizes = [2, 32], strides = [1, 1]} : vector<2x96xf32> to vector<2x32xf32>
    %66 = vector.extract_strided_slice %62 {offsets = [0, 32], sizes = [2, 32], strides = [1, 1]} : vector<2x96xf32> to vector<2x32xf32>
    %67 = vector.extract_strided_slice %62 {offsets = [0, 64], sizes = [2, 32], strides = [1, 1]} : vector<2x96xf32> to vector<2x32xf32>
    %68 = arith.mulf %66, %30 : vector<2x32xf32>
    %69 = arith.mulf %65, %64 : vector<2x32xf32>
    %70 = arith.addf %68, %69 : vector<2x32xf32>
    %71 = math.tanh %70 : vector<2x32xf32>
    %72 = arith.mulf %67, %71 : vector<2x32xf32>
    %cst_24 = arith.constant dense<0.000000e+00> : vector<2x128xf32>
    %73 = tpu.matmul %72, %2, %cst_24 {dimension_numbers = #tpu.dot_dimension_numbers<[1], [0], [0], [1], [0, 0, 1, 1], [], []>} : vector<2x32xf32>, vector<32x128xf32>, vector<2x128xf32> -> vector<2x128xf32>
    %74 = vector.broadcast %6 : vector<1x128xf32> to vector<2x128xf32>
    %75 = arith.addf %73, %74 : vector<2x128xf32>
    %cst_25 = arith.constant dense<0.000000e+00> : vector<2x128xf32>
    %76 = tpu.matmul %53, %4, %cst_25 {dimension_numbers = #tpu.dot_dimension_numbers<[1], [0], [0], [1], [0, 0, 1, 1], [], []>} : vector<2x32xf32>, vector<32x128xf32>, vector<2x128xf32> -> vector<2x128xf32>
    %77 = arith.addf %75, %76 : vector<2x128xf32>
    %78 = vector.extract_strided_slice %77 {offsets = [0, 0], sizes = [2, 96], strides = [1, 1]} : vector<2x128xf32> to vector<2x96xf32>
    %79 = arith.negf %78 : vector<2x96xf32>
    %80 = math.exp %79 : vector<2x96xf32>
    %cst_26 = arith.constant 1.000000e+00 : f32
    %81 = vector.broadcast %cst_26 : f32 to vector<2x96xf32>
    %82 = arith.addf %81, %80 : vector<2x96xf32>
    %83 = arith.divf %81, %82 : vector<2x96xf32>
    %84 = vector.extract_strided_slice %77 {offsets = [0, 96], sizes = [2, 32], strides = [1, 1]} : vector<2x128xf32> to vector<2x32xf32>
    %85 = math.tanh %84 : vector<2x32xf32>
    %86 = vector.extract_strided_slice %83 {offsets = [0, 0], sizes = [2, 32], strides = [1, 1]} : vector<2x96xf32> to vector<2x32xf32>
    %87 = vector.extract_strided_slice %83 {offsets = [0, 32], sizes = [2, 32], strides = [1, 1]} : vector<2x96xf32> to vector<2x32xf32>
    %88 = vector.extract_strided_slice %83 {offsets = [0, 64], sizes = [2, 32], strides = [1, 1]} : vector<2x96xf32> to vector<2x32xf32>
    %89 = arith.mulf %87, %51 : vector<2x32xf32>
    %90 = arith.mulf %86, %85 : vector<2x32xf32>
    %91 = arith.addf %89, %90 : vector<2x32xf32>
    %92 = math.tanh %91 : vector<2x32xf32>
    %93 = arith.mulf %88, %92 : vector<2x32xf32>
    %94 = vector.extract_strided_slice %9 {offsets = [4, 0], sizes = [2, 128], strides = [1, 1]} : vector<16x128xf32> to vector<2x128xf32>
    %cst_27 = arith.constant dense<0.000000e+00> : vector<2x128xf32>
    %95 = tpu.matmul %72, %3, %cst_27 {dimension_numbers = #tpu.dot_dimension_numbers<[1], [0], [0], [1], [0, 0, 1, 1], [], []>} : vector<2x32xf32>, vector<32x128xf32>, vector<2x128xf32> -> vector<2x128xf32>
    %96 = arith.addf %94, %95 : vector<2x128xf32>
    %97 = vector.extract_strided_slice %96 {offsets = [0, 0], sizes = [2, 96], strides = [1, 1]} : vector<2x128xf32> to vector<2x96xf32>
    %98 = arith.negf %97 : vector<2x96xf32>
    %99 = math.exp %98 : vector<2x96xf32>
    %cst_28 = arith.constant 1.000000e+00 : f32
    %100 = vector.broadcast %cst_28 : f32 to vector<2x96xf32>
    %101 = arith.addf %100, %99 : vector<2x96xf32>
    %102 = arith.divf %100, %101 : vector<2x96xf32>
    %103 = vector.extract_strided_slice %96 {offsets = [0, 96], sizes = [2, 32], strides = [1, 1]} : vector<2x128xf32> to vector<2x32xf32>
    %104 = math.tanh %103 : vector<2x32xf32>
    %105 = vector.extract_strided_slice %102 {offsets = [0, 0], sizes = [2, 32], strides = [1, 1]} : vector<2x96xf32> to vector<2x32xf32>
    %106 = vector.extract_strided_slice %102 {offsets = [0, 32], sizes = [2, 32], strides = [1, 1]} : vector<2x96xf32> to vector<2x32xf32>
    %107 = vector.extract_strided_slice %102 {offsets = [0, 64], sizes = [2, 32], strides = [1, 1]} : vector<2x96xf32> to vector<2x32xf32>
    %108 = arith.mulf %106, %70 : vector<2x32xf32>
    %109 = arith.mulf %105, %104 : vector<2x32xf32>
    %110 = arith.addf %108, %109 : vector<2x32xf32>
    %111 = math.tanh %110 : vector<2x32xf32>
    %112 = arith.mulf %107, %111 : vector<2x32xf32>
    %cst_29 = arith.constant dense<0.000000e+00> : vector<2x128xf32>
    %113 = tpu.matmul %112, %2, %cst_29 {dimension_numbers = #tpu.dot_dimension_numbers<[1], [0], [0], [1], [0, 0, 1, 1], [], []>} : vector<2x32xf32>, vector<32x128xf32>, vector<2x128xf32> -> vector<2x128xf32>
    %114 = vector.broadcast %6 : vector<1x128xf32> to vector<2x128xf32>
    %115 = arith.addf %113, %114 : vector<2x128xf32>
    %cst_30 = arith.constant dense<0.000000e+00> : vector<2x128xf32>
    %116 = tpu.matmul %93, %4, %cst_30 {dimension_numbers = #tpu.dot_dimension_numbers<[1], [0], [0], [1], [0, 0, 1, 1], [], []>} : vector<2x32xf32>, vector<32x128xf32>, vector<2x128xf32> -> vector<2x128xf32>
    %117 = arith.addf %115, %116 : vector<2x128xf32>
    %118 = vector.extract_strided_slice %117 {offsets = [0, 0], sizes = [2, 96], strides = [1, 1]} : vector<2x128xf32> to vector<2x96xf32>
    %119 = arith.negf %118 : vector<2x96xf32>
    %120 = math.exp %119 : vector<2x96xf32>
    %cst_31 = arith.constant 1.000000e+00 : f32
    %121 = vector.broadcast %cst_31 : f32 to vector<2x96xf32>
    %122 = arith.addf %121, %120 : vector<2x96xf32>
    %123 = arith.divf %121, %122 : vector<2x96xf32>
    %124 = vector.extract_strided_slice %117 {offsets = [0, 96], sizes = [2, 32], strides = [1, 1]} : vector<2x128xf32> to vector<2x32xf32>
    %125 = math.tanh %124 : vector<2x32xf32>
    %126 = vector.extract_strided_slice %123 {offsets = [0, 0], sizes = [2, 32], strides = [1, 1]} : vector<2x96xf32> to vector<2x32xf32>
    %127 = vector.extract_strided_slice %123 {offsets = [0, 32], sizes = [2, 32], strides = [1, 1]} : vector<2x96xf32> to vector<2x32xf32>
    %128 = vector.extract_strided_slice %123 {offsets = [0, 64], sizes = [2, 32], strides = [1, 1]} : vector<2x96xf32> to vector<2x32xf32>
    %129 = arith.mulf %127, %91 : vector<2x32xf32>
    %130 = arith.mulf %126, %125 : vector<2x32xf32>
    %131 = arith.addf %129, %130 : vector<2x32xf32>
    %132 = math.tanh %131 : vector<2x32xf32>
    %133 = arith.mulf %128, %132 : vector<2x32xf32>
    %134 = vector.extract_strided_slice %9 {offsets = [6, 0], sizes = [2, 128], strides = [1, 1]} : vector<16x128xf32> to vector<2x128xf32>
    %cst_32 = arith.constant dense<0.000000e+00> : vector<2x128xf32>
    %135 = tpu.matmul %112, %3, %cst_32 {dimension_numbers = #tpu.dot_dimension_numbers<[1], [0], [0], [1], [0, 0, 1, 1], [], []>} : vector<2x32xf32>, vector<32x128xf32>, vector<2x128xf32> -> vector<2x128xf32>
    %136 = arith.addf %134, %135 : vector<2x128xf32>
    %137 = vector.extract_strided_slice %136 {offsets = [0, 0], sizes = [2, 96], strides = [1, 1]} : vector<2x128xf32> to vector<2x96xf32>
    %138 = arith.negf %137 : vector<2x96xf32>
    %139 = math.exp %138 : vector<2x96xf32>
    %cst_33 = arith.constant 1.000000e+00 : f32
    %140 = vector.broadcast %cst_33 : f32 to vector<2x96xf32>
    %141 = arith.addf %140, %139 : vector<2x96xf32>
    %142 = arith.divf %140, %141 : vector<2x96xf32>
    %143 = vector.extract_strided_slice %136 {offsets = [0, 96], sizes = [2, 32], strides = [1, 1]} : vector<2x128xf32> to vector<2x32xf32>
    %144 = math.tanh %143 : vector<2x32xf32>
    %145 = vector.extract_strided_slice %142 {offsets = [0, 0], sizes = [2, 32], strides = [1, 1]} : vector<2x96xf32> to vector<2x32xf32>
    %146 = vector.extract_strided_slice %142 {offsets = [0, 32], sizes = [2, 32], strides = [1, 1]} : vector<2x96xf32> to vector<2x32xf32>
    %147 = vector.extract_strided_slice %142 {offsets = [0, 64], sizes = [2, 32], strides = [1, 1]} : vector<2x96xf32> to vector<2x32xf32>
    %148 = arith.mulf %146, %110 : vector<2x32xf32>
    %149 = arith.mulf %145, %144 : vector<2x32xf32>
    %150 = arith.addf %148, %149 : vector<2x32xf32>
    %151 = math.tanh %150 : vector<2x32xf32>
    %152 = arith.mulf %147, %151 : vector<2x32xf32>
    %cst_34 = arith.constant dense<0.000000e+00> : vector<2x128xf32>
    %153 = tpu.matmul %152, %2, %cst_34 {dimension_numbers = #tpu.dot_dimension_numbers<[1], [0], [0], [1], [0, 0, 1, 1], [], []>} : vector<2x32xf32>, vector<32x128xf32>, vector<2x128xf32> -> vector<2x128xf32>
    %154 = vector.broadcast %6 : vector<1x128xf32> to vector<2x128xf32>
    %155 = arith.addf %153, %154 : vector<2x128xf32>
    %cst_35 = arith.constant dense<0.000000e+00> : vector<2x128xf32>
    %156 = tpu.matmul %133, %4, %cst_35 {dimension_numbers = #tpu.dot_dimension_numbers<[1], [0], [0], [1], [0, 0, 1, 1], [], []>} : vector<2x32xf32>, vector<32x128xf32>, vector<2x128xf32> -> vector<2x128xf32>
    %157 = arith.addf %155, %156 : vector<2x128xf32>
    %158 = vector.extract_strided_slice %157 {offsets = [0, 0], sizes = [2, 96], strides = [1, 1]} : vector<2x128xf32> to vector<2x96xf32>
    %159 = arith.negf %158 : vector<2x96xf32>
    %160 = math.exp %159 : vector<2x96xf32>
    %cst_36 = arith.constant 1.000000e+00 : f32
    %161 = vector.broadcast %cst_36 : f32 to vector<2x96xf32>
    %162 = arith.addf %161, %160 : vector<2x96xf32>
    %163 = arith.divf %161, %162 : vector<2x96xf32>
    %164 = vector.extract_strided_slice %157 {offsets = [0, 96], sizes = [2, 32], strides = [1, 1]} : vector<2x128xf32> to vector<2x32xf32>
    %165 = math.tanh %164 : vector<2x32xf32>
    %166 = vector.extract_strided_slice %163 {offsets = [0, 0], sizes = [2, 32], strides = [1, 1]} : vector<2x96xf32> to vector<2x32xf32>
    %167 = vector.extract_strided_slice %163 {offsets = [0, 32], sizes = [2, 32], strides = [1, 1]} : vector<2x96xf32> to vector<2x32xf32>
    %168 = vector.extract_strided_slice %163 {offsets = [0, 64], sizes = [2, 32], strides = [1, 1]} : vector<2x96xf32> to vector<2x32xf32>
    %169 = arith.mulf %167, %131 : vector<2x32xf32>
    %170 = arith.mulf %166, %165 : vector<2x32xf32>
    %171 = arith.addf %169, %170 : vector<2x32xf32>
    %172 = math.tanh %171 : vector<2x32xf32>
    %173 = arith.mulf %168, %172 : vector<2x32xf32>
    %174 = vector.extract_strided_slice %9 {offsets = [8, 0], sizes = [2, 128], strides = [1, 1]} : vector<16x128xf32> to vector<2x128xf32>
    %cst_37 = arith.constant dense<0.000000e+00> : vector<2x128xf32>
    %175 = tpu.matmul %152, %3, %cst_37 {dimension_numbers = #tpu.dot_dimension_numbers<[1], [0], [0], [1], [0, 0, 1, 1], [], []>} : vector<2x32xf32>, vector<32x128xf32>, vector<2x128xf32> -> vector<2x128xf32>
    %176 = arith.addf %174, %175 : vector<2x128xf32>
    %177 = vector.extract_strided_slice %176 {offsets = [0, 0], sizes = [2, 96], strides = [1, 1]} : vector<2x128xf32> to vector<2x96xf32>
    %178 = arith.negf %177 : vector<2x96xf32>
    %179 = math.exp %178 : vector<2x96xf32>
    %cst_38 = arith.constant 1.000000e+00 : f32
    %180 = vector.broadcast %cst_38 : f32 to vector<2x96xf32>
    %181 = arith.addf %180, %179 : vector<2x96xf32>
    %182 = arith.divf %180, %181 : vector<2x96xf32>
    %183 = vector.extract_strided_slice %176 {offsets = [0, 96], sizes = [2, 32], strides = [1, 1]} : vector<2x128xf32> to vector<2x32xf32>
    %184 = math.tanh %183 : vector<2x32xf32>
    %185 = vector.extract_strided_slice %182 {offsets = [0, 0], sizes = [2, 32], strides = [1, 1]} : vector<2x96xf32> to vector<2x32xf32>
    %186 = vector.extract_strided_slice %182 {offsets = [0, 32], sizes = [2, 32], strides = [1, 1]} : vector<2x96xf32> to vector<2x32xf32>
    %187 = vector.extract_strided_slice %182 {offsets = [0, 64], sizes = [2, 32], strides = [1, 1]} : vector<2x96xf32> to vector<2x32xf32>
    %188 = arith.mulf %186, %150 : vector<2x32xf32>
    %189 = arith.mulf %185, %184 : vector<2x32xf32>
    %190 = arith.addf %188, %189 : vector<2x32xf32>
    %191 = math.tanh %190 : vector<2x32xf32>
    %192 = arith.mulf %187, %191 : vector<2x32xf32>
    %cst_39 = arith.constant dense<0.000000e+00> : vector<2x128xf32>
    %193 = tpu.matmul %192, %2, %cst_39 {dimension_numbers = #tpu.dot_dimension_numbers<[1], [0], [0], [1], [0, 0, 1, 1], [], []>} : vector<2x32xf32>, vector<32x128xf32>, vector<2x128xf32> -> vector<2x128xf32>
    %194 = vector.broadcast %6 : vector<1x128xf32> to vector<2x128xf32>
    %195 = arith.addf %193, %194 : vector<2x128xf32>
    %cst_40 = arith.constant dense<0.000000e+00> : vector<2x128xf32>
    %196 = tpu.matmul %173, %4, %cst_40 {dimension_numbers = #tpu.dot_dimension_numbers<[1], [0], [0], [1], [0, 0, 1, 1], [], []>} : vector<2x32xf32>, vector<32x128xf32>, vector<2x128xf32> -> vector<2x128xf32>
    %197 = arith.addf %195, %196 : vector<2x128xf32>
    %198 = vector.extract_strided_slice %197 {offsets = [0, 0], sizes = [2, 96], strides = [1, 1]} : vector<2x128xf32> to vector<2x96xf32>
    %199 = arith.negf %198 : vector<2x96xf32>
    %200 = math.exp %199 : vector<2x96xf32>
    %cst_41 = arith.constant 1.000000e+00 : f32
    %201 = vector.broadcast %cst_41 : f32 to vector<2x96xf32>
    %202 = arith.addf %201, %200 : vector<2x96xf32>
    %203 = arith.divf %201, %202 : vector<2x96xf32>
    %204 = vector.extract_strided_slice %197 {offsets = [0, 96], sizes = [2, 32], strides = [1, 1]} : vector<2x128xf32> to vector<2x32xf32>
    %205 = math.tanh %204 : vector<2x32xf32>
    %206 = vector.extract_strided_slice %203 {offsets = [0, 0], sizes = [2, 32], strides = [1, 1]} : vector<2x96xf32> to vector<2x32xf32>
    %207 = vector.extract_strided_slice %203 {offsets = [0, 32], sizes = [2, 32], strides = [1, 1]} : vector<2x96xf32> to vector<2x32xf32>
    %208 = vector.extract_strided_slice %203 {offsets = [0, 64], sizes = [2, 32], strides = [1, 1]} : vector<2x96xf32> to vector<2x32xf32>
    %209 = arith.mulf %207, %171 : vector<2x32xf32>
    %210 = arith.mulf %206, %205 : vector<2x32xf32>
    %211 = arith.addf %209, %210 : vector<2x32xf32>
    %212 = math.tanh %211 : vector<2x32xf32>
    %213 = arith.mulf %208, %212 : vector<2x32xf32>
    %214 = vector.extract_strided_slice %9 {offsets = [10, 0], sizes = [2, 128], strides = [1, 1]} : vector<16x128xf32> to vector<2x128xf32>
    %cst_42 = arith.constant dense<0.000000e+00> : vector<2x128xf32>
    %215 = tpu.matmul %192, %3, %cst_42 {dimension_numbers = #tpu.dot_dimension_numbers<[1], [0], [0], [1], [0, 0, 1, 1], [], []>} : vector<2x32xf32>, vector<32x128xf32>, vector<2x128xf32> -> vector<2x128xf32>
    %216 = arith.addf %214, %215 : vector<2x128xf32>
    %217 = vector.extract_strided_slice %216 {offsets = [0, 0], sizes = [2, 96], strides = [1, 1]} : vector<2x128xf32> to vector<2x96xf32>
    %218 = arith.negf %217 : vector<2x96xf32>
    %219 = math.exp %218 : vector<2x96xf32>
    %cst_43 = arith.constant 1.000000e+00 : f32
    %220 = vector.broadcast %cst_43 : f32 to vector<2x96xf32>
    %221 = arith.addf %220, %219 : vector<2x96xf32>
    %222 = arith.divf %220, %221 : vector<2x96xf32>
    %223 = vector.extract_strided_slice %216 {offsets = [0, 96], sizes = [2, 32], strides = [1, 1]} : vector<2x128xf32> to vector<2x32xf32>
    %224 = math.tanh %223 : vector<2x32xf32>
    %225 = vector.extract_strided_slice %222 {offsets = [0, 0], sizes = [2, 32], strides = [1, 1]} : vector<2x96xf32> to vector<2x32xf32>
    %226 = vector.extract_strided_slice %222 {offsets = [0, 32], sizes = [2, 32], strides = [1, 1]} : vector<2x96xf32> to vector<2x32xf32>
    %227 = vector.extract_strided_slice %222 {offsets = [0, 64], sizes = [2, 32], strides = [1, 1]} : vector<2x96xf32> to vector<2x32xf32>
    %228 = arith.mulf %226, %190 : vector<2x32xf32>
    %229 = arith.mulf %225, %224 : vector<2x32xf32>
    %230 = arith.addf %228, %229 : vector<2x32xf32>
    %231 = math.tanh %230 : vector<2x32xf32>
    %232 = arith.mulf %227, %231 : vector<2x32xf32>
    %cst_44 = arith.constant dense<0.000000e+00> : vector<2x128xf32>
    %233 = tpu.matmul %232, %2, %cst_44 {dimension_numbers = #tpu.dot_dimension_numbers<[1], [0], [0], [1], [0, 0, 1, 1], [], []>} : vector<2x32xf32>, vector<32x128xf32>, vector<2x128xf32> -> vector<2x128xf32>
    %234 = vector.broadcast %6 : vector<1x128xf32> to vector<2x128xf32>
    %235 = arith.addf %233, %234 : vector<2x128xf32>
    %cst_45 = arith.constant dense<0.000000e+00> : vector<2x128xf32>
    %236 = tpu.matmul %213, %4, %cst_45 {dimension_numbers = #tpu.dot_dimension_numbers<[1], [0], [0], [1], [0, 0, 1, 1], [], []>} : vector<2x32xf32>, vector<32x128xf32>, vector<2x128xf32> -> vector<2x128xf32>
    %237 = arith.addf %235, %236 : vector<2x128xf32>
    %238 = vector.extract_strided_slice %237 {offsets = [0, 0], sizes = [2, 96], strides = [1, 1]} : vector<2x128xf32> to vector<2x96xf32>
    %239 = arith.negf %238 : vector<2x96xf32>
    %240 = math.exp %239 : vector<2x96xf32>
    %cst_46 = arith.constant 1.000000e+00 : f32
    %241 = vector.broadcast %cst_46 : f32 to vector<2x96xf32>
    %242 = arith.addf %241, %240 : vector<2x96xf32>
    %243 = arith.divf %241, %242 : vector<2x96xf32>
    %244 = vector.extract_strided_slice %237 {offsets = [0, 96], sizes = [2, 32], strides = [1, 1]} : vector<2x128xf32> to vector<2x32xf32>
    %245 = math.tanh %244 : vector<2x32xf32>
    %246 = vector.extract_strided_slice %243 {offsets = [0, 0], sizes = [2, 32], strides = [1, 1]} : vector<2x96xf32> to vector<2x32xf32>
    %247 = vector.extract_strided_slice %243 {offsets = [0, 32], sizes = [2, 32], strides = [1, 1]} : vector<2x96xf32> to vector<2x32xf32>
    %248 = vector.extract_strided_slice %243 {offsets = [0, 64], sizes = [2, 32], strides = [1, 1]} : vector<2x96xf32> to vector<2x32xf32>
    %249 = arith.mulf %247, %211 : vector<2x32xf32>
    %250 = arith.mulf %246, %245 : vector<2x32xf32>
    %251 = arith.addf %249, %250 : vector<2x32xf32>
    %252 = math.tanh %251 : vector<2x32xf32>
    %253 = arith.mulf %248, %252 : vector<2x32xf32>
    %254 = vector.extract_strided_slice %9 {offsets = [12, 0], sizes = [2, 128], strides = [1, 1]} : vector<16x128xf32> to vector<2x128xf32>
    %cst_47 = arith.constant dense<0.000000e+00> : vector<2x128xf32>
    %255 = tpu.matmul %232, %3, %cst_47 {dimension_numbers = #tpu.dot_dimension_numbers<[1], [0], [0], [1], [0, 0, 1, 1], [], []>} : vector<2x32xf32>, vector<32x128xf32>, vector<2x128xf32> -> vector<2x128xf32>
    %256 = arith.addf %254, %255 : vector<2x128xf32>
    %257 = vector.extract_strided_slice %256 {offsets = [0, 0], sizes = [2, 96], strides = [1, 1]} : vector<2x128xf32> to vector<2x96xf32>
    %258 = arith.negf %257 : vector<2x96xf32>
    %259 = math.exp %258 : vector<2x96xf32>
    %cst_48 = arith.constant 1.000000e+00 : f32
    %260 = vector.broadcast %cst_48 : f32 to vector<2x96xf32>
    %261 = arith.addf %260, %259 : vector<2x96xf32>
    %262 = arith.divf %260, %261 : vector<2x96xf32>
    %263 = vector.extract_strided_slice %256 {offsets = [0, 96], sizes = [2, 32], strides = [1, 1]} : vector<2x128xf32> to vector<2x32xf32>
    %264 = math.tanh %263 : vector<2x32xf32>
    %265 = vector.extract_strided_slice %262 {offsets = [0, 0], sizes = [2, 32], strides = [1, 1]} : vector<2x96xf32> to vector<2x32xf32>
    %266 = vector.extract_strided_slice %262 {offsets = [0, 32], sizes = [2, 32], strides = [1, 1]} : vector<2x96xf32> to vector<2x32xf32>
    %267 = vector.extract_strided_slice %262 {offsets = [0, 64], sizes = [2, 32], strides = [1, 1]} : vector<2x96xf32> to vector<2x32xf32>
    %268 = arith.mulf %266, %230 : vector<2x32xf32>
    %269 = arith.mulf %265, %264 : vector<2x32xf32>
    %270 = arith.addf %268, %269 : vector<2x32xf32>
    %271 = math.tanh %270 : vector<2x32xf32>
    %272 = arith.mulf %267, %271 : vector<2x32xf32>
    %cst_49 = arith.constant dense<0.000000e+00> : vector<2x128xf32>
    %273 = tpu.matmul %272, %2, %cst_49 {dimension_numbers = #tpu.dot_dimension_numbers<[1], [0], [0], [1], [0, 0, 1, 1], [], []>} : vector<2x32xf32>, vector<32x128xf32>, vector<2x128xf32> -> vector<2x128xf32>
    %274 = vector.broadcast %6 : vector<1x128xf32> to vector<2x128xf32>
    %275 = arith.addf %273, %274 : vector<2x128xf32>
    %cst_50 = arith.constant dense<0.000000e+00> : vector<2x128xf32>
    %276 = tpu.matmul %253, %4, %cst_50 {dimension_numbers = #tpu.dot_dimension_numbers<[1], [0], [0], [1], [0, 0, 1, 1], [], []>} : vector<2x32xf32>, vector<32x128xf32>, vector<2x128xf32> -> vector<2x128xf32>
    %277 = arith.addf %275, %276 : vector<2x128xf32>
    %278 = vector.extract_strided_slice %277 {offsets = [0, 0], sizes = [2, 96], strides = [1, 1]} : vector<2x128xf32> to vector<2x96xf32>
    %279 = arith.negf %278 : vector<2x96xf32>
    %280 = math.exp %279 : vector<2x96xf32>
    %cst_51 = arith.constant 1.000000e+00 : f32
    %281 = vector.broadcast %cst_51 : f32 to vector<2x96xf32>
    %282 = arith.addf %281, %280 : vector<2x96xf32>
    %283 = arith.divf %281, %282 : vector<2x96xf32>
    %284 = vector.extract_strided_slice %277 {offsets = [0, 96], sizes = [2, 32], strides = [1, 1]} : vector<2x128xf32> to vector<2x32xf32>
    %285 = math.tanh %284 : vector<2x32xf32>
    %286 = vector.extract_strided_slice %283 {offsets = [0, 0], sizes = [2, 32], strides = [1, 1]} : vector<2x96xf32> to vector<2x32xf32>
    %287 = vector.extract_strided_slice %283 {offsets = [0, 32], sizes = [2, 32], strides = [1, 1]} : vector<2x96xf32> to vector<2x32xf32>
    %288 = vector.extract_strided_slice %283 {offsets = [0, 64], sizes = [2, 32], strides = [1, 1]} : vector<2x96xf32> to vector<2x32xf32>
    %289 = arith.mulf %287, %251 : vector<2x32xf32>
    %290 = arith.mulf %286, %285 : vector<2x32xf32>
    %291 = arith.addf %289, %290 : vector<2x32xf32>
    %292 = math.tanh %291 : vector<2x32xf32>
    %293 = arith.mulf %288, %292 : vector<2x32xf32>
    %294 = vector.extract_strided_slice %9 {offsets = [14, 0], sizes = [2, 128], strides = [1, 1]} : vector<16x128xf32> to vector<2x128xf32>
    %cst_52 = arith.constant dense<0.000000e+00> : vector<2x128xf32>
    %295 = tpu.matmul %272, %3, %cst_52 {dimension_numbers = #tpu.dot_dimension_numbers<[1], [0], [0], [1], [0, 0, 1, 1], [], []>} : vector<2x32xf32>, vector<32x128xf32>, vector<2x128xf32> -> vector<2x128xf32>
    %296 = arith.addf %294, %295 : vector<2x128xf32>
    %297 = vector.extract_strided_slice %296 {offsets = [0, 0], sizes = [2, 96], strides = [1, 1]} : vector<2x128xf32> to vector<2x96xf32>
    %298 = arith.negf %297 : vector<2x96xf32>
    %299 = math.exp %298 : vector<2x96xf32>
    %cst_53 = arith.constant 1.000000e+00 : f32
    %300 = vector.broadcast %cst_53 : f32 to vector<2x96xf32>
    %301 = arith.addf %300, %299 : vector<2x96xf32>
    %302 = arith.divf %300, %301 : vector<2x96xf32>
    %303 = vector.extract_strided_slice %296 {offsets = [0, 96], sizes = [2, 32], strides = [1, 1]} : vector<2x128xf32> to vector<2x32xf32>
    %304 = math.tanh %303 : vector<2x32xf32>
    %305 = vector.extract_strided_slice %302 {offsets = [0, 0], sizes = [2, 32], strides = [1, 1]} : vector<2x96xf32> to vector<2x32xf32>
    %306 = vector.extract_strided_slice %302 {offsets = [0, 32], sizes = [2, 32], strides = [1, 1]} : vector<2x96xf32> to vector<2x32xf32>
    %307 = vector.extract_strided_slice %302 {offsets = [0, 64], sizes = [2, 32], strides = [1, 1]} : vector<2x96xf32> to vector<2x32xf32>
    %308 = arith.mulf %306, %270 : vector<2x32xf32>
    %309 = arith.mulf %305, %304 : vector<2x32xf32>
    %310 = arith.addf %308, %309 : vector<2x32xf32>
    %311 = math.tanh %310 : vector<2x32xf32>
    %312 = arith.mulf %307, %311 : vector<2x32xf32>
    %cst_54 = arith.constant dense<0.000000e+00> : vector<2x128xf32>
    %313 = tpu.matmul %312, %2, %cst_54 {dimension_numbers = #tpu.dot_dimension_numbers<[1], [0], [0], [1], [0, 0, 1, 1], [], []>} : vector<2x32xf32>, vector<32x128xf32>, vector<2x128xf32> -> vector<2x128xf32>
    %314 = vector.broadcast %6 : vector<1x128xf32> to vector<2x128xf32>
    %315 = arith.addf %313, %314 : vector<2x128xf32>
    %cst_55 = arith.constant dense<0.000000e+00> : vector<2x128xf32>
    %316 = tpu.matmul %293, %4, %cst_55 {dimension_numbers = #tpu.dot_dimension_numbers<[1], [0], [0], [1], [0, 0, 1, 1], [], []>} : vector<2x32xf32>, vector<32x128xf32>, vector<2x128xf32> -> vector<2x128xf32>
    %317 = arith.addf %315, %316 : vector<2x128xf32>
    %318 = vector.extract_strided_slice %317 {offsets = [0, 0], sizes = [2, 96], strides = [1, 1]} : vector<2x128xf32> to vector<2x96xf32>
    %319 = arith.negf %318 : vector<2x96xf32>
    %320 = math.exp %319 : vector<2x96xf32>
    %cst_56 = arith.constant 1.000000e+00 : f32
    %321 = vector.broadcast %cst_56 : f32 to vector<2x96xf32>
    %322 = arith.addf %321, %320 : vector<2x96xf32>
    %323 = arith.divf %321, %322 : vector<2x96xf32>
    %324 = vector.extract_strided_slice %317 {offsets = [0, 96], sizes = [2, 32], strides = [1, 1]} : vector<2x128xf32> to vector<2x32xf32>
    %325 = math.tanh %324 : vector<2x32xf32>
    %326 = vector.extract_strided_slice %323 {offsets = [0, 0], sizes = [2, 32], strides = [1, 1]} : vector<2x96xf32> to vector<2x32xf32>
    %327 = vector.extract_strided_slice %323 {offsets = [0, 32], sizes = [2, 32], strides = [1, 1]} : vector<2x96xf32> to vector<2x32xf32>
    %328 = vector.extract_strided_slice %323 {offsets = [0, 64], sizes = [2, 32], strides = [1, 1]} : vector<2x96xf32> to vector<2x32xf32>
    %329 = arith.mulf %327, %291 : vector<2x32xf32>
    %330 = arith.mulf %326, %325 : vector<2x32xf32>
    %331 = arith.addf %329, %330 : vector<2x32xf32>
    %332 = math.tanh %331 : vector<2x32xf32>
    %333 = arith.mulf %328, %332 : vector<2x32xf32>
    %c0_57 = arith.constant 0 : index
    %c0_58 = arith.constant 0 : index
    %334 = vector.load %arg7[%c0_57, %c0_58] : memref<32x1xf32, #tpu.memory_space<vmem>>, vector<32x1xf32>
    %cst_59 = arith.constant dense<0.000000e+00> : vector<2x1xf32>
    %335 = tpu.matmul %333, %334, %cst_59 {dimension_numbers = #tpu.dot_dimension_numbers<[1], [0], [0], [1], [0, 0, 1, 1], [], []>} : vector<2x32xf32>, vector<32x1xf32>, vector<2x1xf32> -> vector<2x1xf32>
    %c0_60 = arith.constant 0 : index
    %c0_61 = arith.constant 0 : index
    %336 = vector.load %arg8[%c0_60, %c0_61] : memref<1x1xf32, #tpu.memory_space<vmem>>, vector<1x1xf32>
    %337 = vector.broadcast %336 : vector<1x1xf32> to vector<2x1xf32>
    %338 = arith.addf %335, %337 : vector<2x1xf32>
    %c0_62 = arith.constant 0 : index
    %c0_63 = arith.constant 0 : index
    %339 = vector.load %arg9[%c0_62, %c0_63] : memref<2x1xf32, #tpu.memory_space<vmem>>, vector<2x1xf32>
    tpu.vector_store %arg9[%c0_62, %c0_63], %338 {strides = array<i32>} : memref<2x1xf32, #tpu.memory_space<vmem>>, vector<2x1xf32>,
    return
  }
}

</mosaic_0001>

<llo_original>
// kernel: lstm_model.1
$region0: #{lstm_model.1}
  #allocation0 [shape = 'u32[]', space=smem, size = 0x4, offset = 0x4, fixed_abs, tag = 'smem constant byte address 0x4 - core index']
  #allocation1 [shape = 'u32[144,128]{1,0:T(1,128)}', space=vmem, size = 0x12000, scoped, tag = 'internal scratch']
  #allocation2 [shape = 'f32[1,1]{1,0:T(1,128)S(1)}', space=vmem, size = 0x200, scoped, tag = 'scoped memory for lstm_model.1']
  %s0 = inlined_call_operand.vmem [shape: f32[16,16], index: 0, kind: input, shape index: {}]
  %s1 = inlined_call_operand.vmem [shape: f32[16,128], index: 1, kind: input, shape index: {}]
  %s2 = inlined_call_operand.vmem [shape: f32[32,128], index: 2, kind: input, shape index: {}]
  %s3 = inlined_call_operand.vmem [shape: f32[1,128], index: 3, kind: input, shape index: {}]
  %s4 = inlined_call_operand.vmem [shape: f32[32,128], index: 4, kind: input, shape index: {}]
  %s5 = inlined_call_operand.vmem [shape: f32[32,128], index: 5, kind: input, shape index: {}]
  %s6 = inlined_call_operand.vmem [shape: f32[1,128], index: 6, kind: input, shape index: {}]
  %s7 = inlined_call_operand.vmem [shape: f32[32,1], index: 7, kind: input, shape index: {}]
  %s8 = inlined_call_operand.<no memory space> [shape: f32[1,1], index: 8, kind: input, shape index: {}]
  %s9 = inlined_call_operand.vmem [shape: f32[2,1], index: 9, kind: output, shape index: {}]
  %s10 = sld [smem:[#allocation0]]
  $region46: #{lstm_model.1} parent=0
    _
  %s12 = ssub.s32 1, %s10
  %s13 = scalar_select 0, %s12, %s10
  %v14 = vstv %s8
  %15 = vst [vmem:[#allocation2] sm:$0x1] %v14
  // Predicated region
  $region2: #{lstm_model.1} parent=0 // pred_check
    _
  $region3: #{lstm_model.1} parent=0 // pred_check_branch
    %17 = sbr.rel (0) target = $region5
  $region4: #{lstm_model.1} parent=0 // pred_region
    _
  $region5: #{lstm_model.1} parent=0 // pred_fallthru
    _
  // Predicated region
  $region6: #{lstm_model.1} parent=0 // pred_check
    _
  $region7: #{lstm_model.1} parent=0 // pred_check_branch
    %19 = sbr.rel (0) target = $region9
  $region8: #{lstm_model.1} parent=0 // pred_region
    _
  $region9: #{lstm_model.1} parent=0 // pred_fallthru
    _
  // Predicated region
  $region10: #{lstm_model.1} parent=0 // pred_check
    _
  $region11: #{lstm_model.1} parent=0 // pred_check_branch
    %21 = sbr.rel (0) target = $region13
  $region12: #{lstm_model.1} parent=0 // pred_region
    _
  $region13: #{lstm_model.1} parent=0 // pred_fallthru
    _
  // Predicated region
  $region14: #{lstm_model.1} parent=0 // pred_check
    _
  $region15: #{lstm_model.1} parent=0 // pred_check_branch
    %23 = sbr.rel (0) target = $region17
  $region16: #{lstm_model.1} parent=0 // pred_region
    _
  $region17: #{lstm_model.1} parent=0 // pred_fallthru
    _
  // Predicated region
  $region18: #{lstm_model.1} parent=0 // pred_check
    _
  $region19: #{lstm_model.1} parent=0 // pred_check_branch
    %25 = sbr.rel (0) target = $region21
  $region20: #{lstm_model.1} parent=0 // pred_region
    _
  $region21: #{lstm_model.1} parent=0 // pred_fallthru
    _
  // Predicated region
  $region22: #{lstm_model.1} parent=0 // pred_check
    _
  $region23: #{lstm_model.1} parent=0 // pred_check_branch
    %27 = sbr.rel (0) target = $region25
  $region24: #{lstm_model.1} parent=0 // pred_region
    _
  $region25: #{lstm_model.1} parent=0 // pred_fallthru
    _
  // Predicated region
  $region26: #{lstm_model.1} parent=0 // pred_check
    _
  $region27: #{lstm_model.1} parent=0 // pred_check_branch
    %29 = sbr.rel (0) target = $region29
  $region28: #{lstm_model.1} parent=0 // pred_region
    _
  $region29: #{lstm_model.1} parent=0 // pred_fallthru
    _
  // Predicated region
  $region30: #{lstm_model.1} parent=0 // pred_check
    _
  $region31: #{lstm_model.1} parent=0 // pred_check_branch
    %31 = sbr.rel (0) target = $region33
  $region32: #{lstm_model.1} parent=0 // pred_region
    _
  $region33: #{lstm_model.1} parent=0 // pred_fallthru
    _
  // Predicated region
  $region34: #{lstm_model.1} parent=0 // pred_check
    _
  $region35: #{lstm_model.1} parent=0 // pred_check_branch
    %33 = sbr.rel (0) target = $region37
  $region36: #{lstm_model.1} parent=0 // pred_region
    _
  $region37: #{lstm_model.1} parent=0 // pred_fallthru
    _
  %v34 = vld [vmem:[%s0] sm:$0xff]
  %v35 = vld [vmem:[%s0 + $0x8] sm:$0xff]
  %v36 = vld [vmem:[%s1] sm:$0xff]
  %v37 = vld [vmem:[%s1 + $0x8] sm:$0xff]
  %v38 = vld [vmem:[%s4] sm:$0xff]
  %v39 = vld [vmem:[%s4 + $0x8] sm:$0xff]
  %v40 = vld [vmem:[%s4 + $0x10] sm:$0xff]
  %v41 = vld [vmem:[%s4 + $0x18] sm:$0xff]
  %v42 = vld [vmem:[%s2] sm:$0xff]
  %v43 = vld [vmem:[%s2 + $0x8] sm:$0xff]
  %v44 = vld [vmem:[%s2 + $0x10] sm:$0xff]
  %v45 = vld [vmem:[%s2 + $0x18] sm:$0xff]
  %v46 = vld [vmem:[%s5] sm:$0xff]
  %v47 = vld [vmem:[%s5 + $0x8] sm:$0xff]
  %v48 = vld [vmem:[%s5 + $0x10] sm:$0xff]
  %v49 = vld [vmem:[%s5 + $0x18] sm:$0xff]
  %v50 = vld [vmem:[%s3] sm:$0x1]
  %v51 = vld [vmem:[%s6] sm:$0x1]
  %v53 = vlaneseq
  %v54 = vshrl.u32 %v53, 7
  %v55 = vsub.s32 0, %v54
  %v56 = vrot.slane %v50, %v55
  %vm58 = vcmask 130048
  %v60 = vsel %vm58, %v34, 0
  %v63 = vsel %vm58, %v35, 0
  %65 = vmatprep.subr.mxu0 0.0
  %66 = vmatpush1.msra.mxu0 %v36
  %67 = vmatprep.subr.mxu0 0.0
  %68 = vmatpush1.msra.mxu0 %v37
  %69 = vmatprep.subr.mxu0 0.0
  %70 = vmatpush1.msra.mxu0 0.0
  %71 = vmatprep.subr.mxu0 0.0
  %72 = vmatpush1.msra.mxu0 0.0
  %73 = vmatprep.subr.mxu0 0.0
  %74 = vmatpush1.msra.mxu0 0.0
  %75 = vmatprep.subr.mxu0 0.0
  %76 = vmatpush1.msra.mxu0 0.0
  %77 = vmatprep.subr.mxu0 0.0
  %78 = vmatpush1.msra.mxu0 0.0
  %79 = vmatprep.subr.mxu0 0.0
  %80 = vmatpush1.msra.mxu0 0.0
  %81 = vmatprep.subr.mxu0 0.0
  %82 = vmatpush1.msra.mxu0 0.0
  %83 = vmatprep.subr.mxu0 0.0
  %84 = vmatpush1.msra.mxu0 0.0
  %85 = vmatprep.subr.mxu0 0.0
  %86 = vmatpush1.msra.mxu0 0.0
  %87 = vmatprep.subr.mxu0 0.0
  %88 = vmatpush1.msra.mxu0 0.0
  %89 = vmatprep.subr.mxu0 0.0
  %90 = vmatpush1.msra.mxu0 0.0
  %91 = vmatprep.subr.mxu0 0.0
  %92 = vmatpush1.msra.mxu0 0.0
  %93 = vmatprep.subr.mxu0 0.0
  %94 = vmatpush1.msra.mxu0 0.0
  %95 = vmatprep.subr.mxu0 0.0
  %96 = vmatpush1.msra.mxu0 0.0
  %97 = vmatprep.subr.mxu0 0.0
  %98 = vmatpush1.msra.mxu0 0.0
  %99 = vmatprep.subr.mxu0 0.0
  %100 = vmatpush1.msra.mxu0 0.0
  %101 = vmatprep.subr.mxu0 0.0
  %102 = vmatpush1.msra.mxu0 0.0
  %103 = vmatprep.subr.mxu0 0.0
  %104 = vmatpush1.msra.mxu0 0.0
  %105 = vmatprep.subr.mxu0 0.0
  %106 = vmatpush1.msra.mxu0 0.0
  %107 = vmatprep.subr.mxu0 0.0
  %108 = vmatpush1.msra.mxu0 0.0
  %109 = vmatprep.subr.mxu0 0.0
  %110 = vmatpush1.msra.mxu0 0.0
  %111 = vmatprep.subr.mxu0 0.0
  %112 = vmatpush1.msra.mxu0 0.0
  %113 = vmatprep.subr.mxu0 0.0
  %114 = vmatpush1.msra.mxu0 0.0
  %115 = vmatprep.subr.mxu0 0.0
  %116 = vmatpush1.msra.mxu0 0.0
  %117 = vmatprep.subr.mxu0 0.0
  %118 = vmatpush1.msra.mxu0 0.0
  %119 = vmatprep.subr.mxu0 0.0
  %120 = vmatpush1.msra.mxu0 0.0
  %121 = vmatprep.subr.mxu0 0.0
  %122 = vmatpush1.msra.mxu0 0.0
  %123 = vmatprep.subr.mxu0 0.0
  %124 = vmatpush1.msra.mxu0 0.0
  %125 = vmatprep.subr.mxu0 0.0
  %126 = vmatpush1.msra.mxu0 0.0
  %127 = vmatprep.subr.mxu0 0.0
  %128 = vmatpush1.msra.mxu0 0.0
  %129 = vmatprep.mubr.f32.mxu0 0.0
  %130 = vmatmul.mubr.f32.gmra.mrb[0].mxu0 %v60
  %v131 = vpop.f32.mrb[0].mxu0
  %v132 = vadd.f32 %v56, %v131
  %v133 = vpop.f32.mrb[0].mxu0
  %134 = vmatprep.mubr.f32.mxu0 0.0
  %135 = vmatmul.mubr.f32.gmra.mrb[0].mxu0 %v63
  %v136 = vpop.f32.mrb[0].mxu0
  %v137 = vadd.f32 %v56, %v136
  %v138 = vpop.f32.mrb[0].mxu0
  %139 = vdwg.mxu0
  %vm140 = vcmask 261120
  %v142 = vsel %vm140, 0.0, 0
  %144 = vmatprep.subr.mxu0 0.0
  %145 = vmatpush1.msra.mxu0 %v42
  %146 = vmatprep.subr.mxu0 0.0
  %147 = vmatpush1.msra.mxu0 %v43
  %148 = vmatprep.subr.mxu0 0.0
  %149 = vmatpush1.msra.mxu0 %v44
  %150 = vmatprep.subr.mxu0 0.0
  %151 = vmatpush1.msra.mxu0 %v45
  %152 = vmatprep.subr.mxu0 0.0
  %153 = vmatpush1.msra.mxu0 0.0
  %154 = vmatprep.subr.mxu0 0.0
  %155 = vmatpush1.msra.mxu0 0.0
  %156 = vmatprep.subr.mxu0 0.0
  %157 = vmatpush1.msra.mxu0 0.0
  %158 = vmatprep.subr.mxu0 0.0
  %159 = vmatpush1.msra.mxu0 0.0
  %160 = vmatprep.subr.mxu0 0.0
  %161 = vmatpush1.msra.mxu0 0.0
  %162 = vmatprep.subr.mxu0 0.0
  %163 = vmatpush1.msra.mxu0 0.0
  %164 = vmatprep.subr.mxu0 0.0
  %165 = vmatpush1.msra.mxu0 0.0
  %166 = vmatprep.subr.mxu0 0.0
  %167 = vmatpush1.msra.mxu0 0.0
  %168 = vmatprep.subr.mxu0 0.0
  %169 = vmatpush1.msra.mxu0 0.0
  %170 = vmatprep.subr.mxu0 0.0
  %171 = vmatpush1.msra.mxu0 0.0
  %172 = vmatprep.subr.mxu0 0.0
  %173 = vmatpush1.msra.mxu0 0.0
  %174 = vmatprep.subr.mxu0 0.0
  %175 = vmatpush1.msra.mxu0 0.0
  %176 = vmatprep.subr.mxu0 0.0
  %177 = vmatpush1.msra.mxu0 0.0
  %178 = vmatprep.subr.mxu0 0.0
  %179 = vmatpush1.msra.mxu0 0.0
  %180 = vmatprep.subr.mxu0 0.0
  %181 = vmatpush1.msra.mxu0 0.0
  %182 = vmatprep.subr.mxu0 0.0
  %183 = vmatpush1.msra.mxu0 0.0
  %184 = vmatprep.subr.mxu0 0.0
  %185 = vmatpush1.msra.mxu0 0.0
  %186 = vmatprep.subr.mxu0 0.0
  %187 = vmatpush1.msra.mxu0 0.0
  %188 = vmatprep.subr.mxu0 0.0
  %189 = vmatpush1.msra.mxu0 0.0
  %190 = vmatprep.subr.mxu0 0.0
  %191 = vmatpush1.msra.mxu0 0.0
  %192 = vmatprep.subr.mxu0 0.0
  %193 = vmatpush1.msra.mxu0 0.0
  %194 = vmatprep.subr.mxu0 0.0
  %195 = vmatpush1.msra.mxu0 0.0
  %196 = vmatprep.subr.mxu0 0.0
  %197 = vmatpush1.msra.mxu0 0.0
  %198 = vmatprep.subr.mxu0 0.0
  %199 = vmatpush1.msra.mxu0 0.0
  %200 = vmatprep.subr.mxu0 0.0
  %201 = vmatpush1.msra.mxu0 0.0
  %202 = vmatprep.subr.mxu0 0.0
  %203 = vmatpush1.msra.mxu0 0.0
  %204 = vmatprep.subr.mxu0 0.0
  %205 = vmatpush1.msra.mxu0 0.0
  %206 = vmatprep.subr.mxu0 0.0
  %207 = vmatpush1.msra.mxu0 0.0
  %208 = vmatprep.mubr.f32.mxu0 0.0
  %209 = vmatmul.mubr.f32.gmra.mrb[0].mxu0 %v142
  %v210 = vpop.f32.mrb[0].mxu0
  %v211 = vadd.f32 0.0, %v210
  %v212 = vpop.f32.mrb[0].mxu0
  %213 = vdwg.mxu0
  %v214 = vadd.f32 %v132, %v211
  %v215 = vxor.u32 %v214, 2147483648
  %v216 = vmul.f32 %v215, 1.442695
  %v217 = vpow.pop %v216
  %v218 = vadd.f32 %v217, 1.0
  %v219 = vrcp.pop %v218
  %v220 = vmul.f32 1.0, %v219
  %v221 = vtanh.pop %v214
  %v222 = vmul.f32 %v220, 0.0
  %224 = vrot.lane.b32.xlu0 %v221, 32
  %v225 = vpop.permute.xlu0 %224
  %v227 = vmul.f32 %v220, %v225
  %229 = vrot.lane.b32.xlu0 %v227, 32
  %v230 = vpop.permute.xlu0 %229
  %v232 = vadd.f32 %v222, %v230
  %v233 = vtanh.pop %v232
  %235 = vrot.lane.b32.xlu0 %v233, 32
  %v236 = vpop.permute.xlu0 %235
  %v238 = vmul.f32 %v220, %v236
  %v240 = vlaneseq
  %v241 = vshrl.u32 %v240, 7
  %v242 = vsub.s32 0, %v241
  %v243 = vrot.slane %v51, %v242
  %246 = vrot.lane.b32.xlu0 %v238, 64
  %v247 = vpop.permute.xlu0 %246
  %v248 = vsel %vm140, %v247, 0
  %250 = vmatprep.subr.mxu0 0.0
  %251 = vmatpush1.msra.mxu0 %v38
  %252 = vmatprep.subr.mxu0 0.0
  %253 = vmatpush1.msra.mxu0 %v39
  %254 = vmatprep.subr.mxu0 0.0
  %255 = vmatpush1.msra.mxu0 %v40
  %256 = vmatprep.subr.mxu0 0.0
  %257 = vmatpush1.msra.mxu0 %v41
  %258 = vmatprep.subr.mxu0 0.0
  %259 = vmatpush1.msra.mxu0 0.0
  %260 = vmatprep.subr.mxu0 0.0
  %261 = vmatpush1.msra.mxu0 0.0
  %262 = vmatprep.subr.mxu0 0.0
  %263 = vmatpush1.msra.mxu0 0.0
  %264 = vmatprep.subr.mxu0 0.0
  %265 = vmatpush1.msra.mxu0 0.0
  %266 = vmatprep.subr.mxu0 0.0
  %267 = vmatpush1.msra.mxu0 0.0
  %268 = vmatprep.subr.mxu0 0.0
  %269 = vmatpush1.msra.mxu0 0.0
  %270 = vmatprep.subr.mxu0 0.0
  %271 = vmatpush1.msra.mxu0 0.0
  %272 = vmatprep.subr.mxu0 0.0
  %273 = vmatpush1.msra.mxu0 0.0
  %274 = vmatprep.subr.mxu0 0.0
  %275 = vmatpush1.msra.mxu0 0.0
  %276 = vmatprep.subr.mxu0 0.0
  %277 = vmatpush1.msra.mxu0 0.0
  %278 = vmatprep.subr.mxu0 0.0
  %279 = vmatpush1.msra.mxu0 0.0
  %280 = vmatprep.subr.mxu0 0.0
  %281 = vmatpush1.msra.mxu0 0.0
  %282 = vmatprep.subr.mxu0 0.0
  %283 = vmatpush1.msra.mxu0 0.0
  %284 = vmatprep.subr.mxu0 0.0
  %285 = vmatpush1.msra.mxu0 0.0
  %286 = vmatprep.subr.mxu0 0.0
  %287 = vmatpush1.msra.mxu0 0.0
  %288 = vmatprep.subr.mxu0 0.0
  %289 = vmatpush1.msra.mxu0 0.0
  %290 = vmatprep.subr.mxu0 0.0
  %291 = vmatpush1.msra.mxu0 0.0
  %292 = vmatprep.subr.mxu0 0.0
  %293 = vmatpush1.msra.mxu0 0.0
  %294 = vmatprep.subr.mxu0 0.0
  %295 = vmatpush1.msra.mxu0 0.0
  %296 = vmatprep.subr.mxu0 0.0
  %297 = vmatpush1.msra.mxu0 0.0
  %298 = vmatprep.subr.mxu0 0.0
  %299 = vmatpush1.msra.mxu0 0.0
  %300 = vmatprep.subr.mxu0 0.0
  %301 = vmatpush1.msra.mxu0 0.0
  %302 = vmatprep.subr.mxu0 0.0
  %303 = vmatpush1.msra.mxu0 0.0
  %304 = vmatprep.subr.mxu0 0.0
  %305 = vmatpush1.msra.mxu0 0.0
  %306 = vmatprep.subr.mxu0 0.0
  %307 = vmatpush1.msra.mxu0 0.0
  %308 = vmatprep.subr.mxu0 0.0
  %309 = vmatpush1.msra.mxu0 0.0
  %310 = vmatprep.subr.mxu0 0.0
  %311 = vmatpush1.msra.mxu0 0.0
  %312 = vmatprep.subr.mxu0 0.0
  %313 = vmatpush1.msra.mxu0 0.0
  %314 = vmatprep.mubr.f32.mxu0 0.0
  %315 = vmatmul.mubr.f32.gmra.mrb[0].mxu0 %v248
  %v316 = vpop.f32.mrb[0].mxu0
  %v317 = vadd.f32 %v243, %v316
  %v318 = vpop.f32.mrb[0].mxu0
  %319 = vdwg.mxu0
  %320 = vmatprep.subr.mxu0 0.0
  %321 = vmatpush1.msra.mxu0 %v46
  %322 = vmatprep.subr.mxu0 0.0
  %323 = vmatpush1.msra.mxu0 %v47
  %324 = vmatprep.subr.mxu0 0.0
  %325 = vmatpush1.msra.mxu0 %v48
  %326 = vmatprep.subr.mxu0 0.0
  %327 = vmatpush1.msra.mxu0 %v49
  %328 = vmatprep.subr.mxu0 0.0
  %329 = vmatpush1.msra.mxu0 0.0
  %330 = vmatprep.subr.mxu0 0.0
  %331 = vmatpush1.msra.mxu0 0.0
  %332 = vmatprep.subr.mxu0 0.0
  %333 = vmatpush1.msra.mxu0 0.0
  %334 = vmatprep.subr.mxu0 0.0
  %335 = vmatpush1.msra.mxu0 0.0
  %336 = vmatprep.subr.mxu0 0.0
  %337 = vmatpush1.msra.mxu0 0.0
  %338 = vmatprep.subr.mxu0 0.0
  %339 = vmatpush1.msra.mxu0 0.0
  %340 = vmatprep.subr.mxu0 0.0
  %341 = vmatpush1.msra.mxu0 0.0
  %342 = vmatprep.subr.mxu0 0.0
  %343 = vmatpush1.msra.mxu0 0.0
  %344 = vmatprep.subr.mxu0 0.0
  %345 = vmatpush1.msra.mxu0 0.0
  %346 = vmatprep.subr.mxu0 0.0
  %347 = vmatpush1.msra.mxu0 0.0
  %348 = vmatprep.subr.mxu0 0.0
  %349 = vmatpush1.msra.mxu0 0.0
  %350 = vmatprep.subr.mxu0 0.0
  %351 = vmatpush1.msra.mxu0 0.0
  %352 = vmatprep.subr.mxu0 0.0
  %353 = vmatpush1.msra.mxu0 0.0
  %354 = vmatprep.subr.mxu0 0.0
  %355 = vmatpush1.msra.mxu0 0.0
  %356 = vmatprep.subr.mxu0 0.0
  %357 = vmatpush1.msra.mxu0 0.0
  %358 = vmatprep.subr.mxu0 0.0
  %359 = vmatpush1.msra.mxu0 0.0
  %360 = vmatprep.subr.mxu0 0.0
  %361 = vmatpush1.msra.mxu0 0.0
  %362 = vmatprep.subr.mxu0 0.0
  %363 = vmatpush1.msra.mxu0 0.0
  %364 = vmatprep.subr.mxu0 0.0
  %365 = vmatpush1.msra.mxu0 0.0
  %366 = vmatprep.subr.mxu0 0.0
  %367 = vmatpush1.msra.mxu0 0.0
  %368 = vmatprep.subr.mxu0 0.0
  %369 = vmatpush1.msra.mxu0 0.0
  %370 = vmatprep.subr.mxu0 0.0
  %371 = vmatpush1.msra.mxu0 0.0
  %372 = vmatprep.subr.mxu0 0.0
  %373 = vmatpush1.msra.mxu0 0.0
  %374 = vmatprep.subr.mxu0 0.0
  %375 = vmatpush1.msra.mxu0 0.0
  %376 = vmatprep.subr.mxu0 0.0
  %377 = vmatpush1.msra.mxu0 0.0
  %378 = vmatprep.subr.mxu0 0.0
  %379 = vmatpush1.msra.mxu0 0.0
  %380 = vmatprep.subr.mxu0 0.0
  %381 = vmatpush1.msra.mxu0 0.0
  %382 = vmatprep.subr.mxu0 0.0
  %383 = vmatpush1.msra.mxu0 0.0
  %384 = vmatprep.mubr.f32.mxu0 0.0
  %385 = vmatmul.mubr.f32.gmra.mrb[0].mxu0 %v142
  %v386 = vpop.f32.mrb[0].mxu0
  %v387 = vadd.f32 0.0, %v386
  %v388 = vpop.f32.mrb[0].mxu0
  %389 = vdwg.mxu0
  %v390 = vadd.f32 %v317, %v387
  %v391 = vxor.u32 %v390, 2147483648
  %v392 = vmul.f32 %v391, 1.442695
  %v393 = vpow.pop %v392
  %v394 = vadd.f32 %v393, 1.0
  %v395 = vrcp.pop %v394
  %v396 = vmul.f32 1.0, %v395
  %v397 = vtanh.pop %v390
  %v398 = vmul.f32 %v396, 0.0
  %400 = vrot.lane.b32.xlu0 %v397, 32
  %v401 = vpop.permute.xlu0 %400
  %v403 = vmul.f32 %v396, %v401
  %405 = vrot.lane.b32.xlu0 %v403, 32
  %v406 = vpop.permute.xlu0 %405
  %v408 = vadd.f32 %v398, %v406
  %v409 = vtanh.pop %v408
  %411 = vrot.lane.b32.xlu0 %v409, 32
  %v412 = vpop.permute.xlu0 %411
  %v414 = vmul.f32 %v396, %v412
  %415 = vmatprep.subr.mxu0 0.0
  %416 = vmatpush1.msra.mxu0 %v42
  %417 = vmatprep.subr.mxu0 0.0
  %418 = vmatpush1.msra.mxu0 %v43
  %419 = vmatprep.subr.mxu0 0.0
  %420 = vmatpush1.msra.mxu0 %v44
  %421 = vmatprep.subr.mxu0 0.0
  %422 = vmatpush1.msra.mxu0 %v45
  %423 = vmatprep.subr.mxu0 0.0
  %424 = vmatpush1.msra.mxu0 0.0
  %425 = vmatprep.subr.mxu0 0.0
  %426 = vmatpush1.msra.mxu0 0.0
  %427 = vmatprep.subr.mxu0 0.0
  %428 = vmatpush1.msra.mxu0 0.0
  %429 = vmatprep.subr.mxu0 0.0
  %430 = vmatpush1.msra.mxu0 0.0
  %431 = vmatprep.subr.mxu0 0.0
  %432 = vmatpush1.msra.mxu0 0.0
  %433 = vmatprep.subr.mxu0 0.0
  %434 = vmatpush1.msra.mxu0 0.0
  %435 = vmatprep.subr.mxu0 0.0
  %436 = vmatpush1.msra.mxu0 0.0
  %437 = vmatprep.subr.mxu0 0.0
  %438 = vmatpush1.msra.mxu0 0.0
  %439 = vmatprep.subr.mxu0 0.0
  %440 = vmatpush1.msra.mxu0 0.0
  %441 = vmatprep.subr.mxu0 0.0
  %442 = vmatpush1.msra.mxu0 0.0
  %443 = vmatprep.subr.mxu0 0.0
  %444 = vmatpush1.msra.mxu0 0.0
  %445 = vmatprep.subr.mxu0 0.0
  %446 = vmatpush1.msra.mxu0 0.0
  %447 = vmatprep.subr.mxu0 0.0
  %448 = vmatpush1.msra.mxu0 0.0
  %449 = vmatprep.subr.mxu0 0.0
  %450 = vmatpush1.msra.mxu0 0.0
  %451 = vmatprep.subr.mxu0 0.0
  %452 = vmatpush1.msra.mxu0 0.0
  %453 = vmatprep.subr.mxu0 0.0
  %454 = vmatpush1.msra.mxu0 0.0
  %455 = vmatprep.subr.mxu0 0.0
  %456 = vmatpush1.msra.mxu0 0.0
  %457 = vmatprep.subr.mxu0 0.0
  %458 = vmatpush1.msra.mxu0 0.0
  %459 = vmatprep.subr.mxu0 0.0
  %460 = vmatpush1.msra.mxu0 0.0
  %461 = vmatprep.subr.mxu0 0.0
  %462 = vmatpush1.msra.mxu0 0.0
  %463 = vmatprep.subr.mxu0 0.0
  %464 = vmatpush1.msra.mxu0 0.0
  %465 = vmatprep.subr.mxu0 0.0
  %466 = vmatpush1.msra.mxu0 0.0
  %467 = vmatprep.subr.mxu0 0.0
  %468 = vmatpush1.msra.mxu0 0.0
  %469 = vmatprep.subr.mxu0 0.0
  %470 = vmatpush1.msra.mxu0 0.0
  %471 = vmatprep.subr.mxu0 0.0
  %472 = vmatpush1.msra.mxu0 0.0
  %473 = vmatprep.subr.mxu0 0.0
  %474 = vmatpush1.msra.mxu0 0.0
  %475 = vmatprep.subr.mxu0 0.0
  %476 = vmatpush1.msra.mxu0 0.0
  %477 = vmatprep.subr.mxu0 0.0
  %478 = vmatpush1.msra.mxu0 0.0
  %479 = vmatprep.mubr.f32.mxu0 0.0
  %480 = vmatmul.mubr.f32.gmra.mrb[0].mxu0 %v248
  %v481 = vpop.f32.mrb[0].mxu0
  %v482 = vadd.f32 0.0, %v481
  %v483 = vpop.f32.mrb[0].mxu0
  %484 = vdwg.mxu0
  %v486 = vrot.slane %v482, 6
  %v488 = vadd.f32 %v132, %v486
  %v489 = vxor.u32 %v488, 2147483648
  %v490 = vmul.f32 %v489, 1.442695
  %v491 = vpow.pop %v490
  %v492 = vadd.f32 %v491, 1.0
  %v493 = vrcp.pop %v492
  %v494 = vmul.f32 1.0, %v493
  %v495 = vtanh.pop %v488
  %v497 = vrot.slane %v232, 6
  %v499 = vmul.f32 %v494, %v497
  %501 = vrot.lane.b32.xlu0 %v495, 32
  %v502 = vpop.permute.xlu0 %501
  %v504 = vmul.f32 %v494, %v502
  %506 = vrot.lane.b32.xlu0 %v504, 32
  %v507 = vpop.permute.xlu0 %506
  %v509 = vadd.f32 %v499, %v507
  %v510 = vtanh.pop %v509
  %512 = vrot.lane.b32.xlu0 %v510, 32
  %v513 = vpop.permute.xlu0 %512
  %v515 = vmul.f32 %v494, %v513
  %v517 = vrot.slane %v515, 2
  %518 = vrot.lane.b32.xlu0 %v517, 64
  %v519 = vpop.permute.xlu0 %518
  %v520 = vsel %vm140, %v519, 0
  %522 = vmatprep.subr.mxu0 0.0
  %523 = vmatpush1.msra.mxu0 %v38
  %524 = vmatprep.subr.mxu0 0.0
  %525 = vmatpush1.msra.mxu0 %v39
  %526 = vmatprep.subr.mxu0 0.0
  %527 = vmatpush1.msra.mxu0 %v40
  %528 = vmatprep.subr.mxu0 0.0
  %529 = vmatpush1.msra.mxu0 %v41
  %530 = vmatprep.subr.mxu0 0.0
  %531 = vmatpush1.msra.mxu0 0.0
  %532 = vmatprep.subr.mxu0 0.0
  %533 = vmatpush1.msra.mxu0 0.0
  %534 = vmatprep.subr.mxu0 0.0
  %535 = vmatpush1.msra.mxu0 0.0
  %536 = vmatprep.subr.mxu0 0.0
  %537 = vmatpush1.msra.mxu0 0.0
  %538 = vmatprep.subr.mxu0 0.0
  %539 = vmatpush1.msra.mxu0 0.0
  %540 = vmatprep.subr.mxu0 0.0
  %541 = vmatpush1.msra.mxu0 0.0
  %542 = vmatprep.subr.mxu0 0.0
  %543 = vmatpush1.msra.mxu0 0.0
  %544 = vmatprep.subr.mxu0 0.0
  %545 = vmatpush1.msra.mxu0 0.0
  %546 = vmatprep.subr.mxu0 0.0
  %547 = vmatpush1.msra.mxu0 0.0
  %548 = vmatprep.subr.mxu0 0.0
  %549 = vmatpush1.msra.mxu0 0.0
  %550 = vmatprep.subr.mxu0 0.0
  %551 = vmatpush1.msra.mxu0 0.0
  %552 = vmatprep.subr.mxu0 0.0
  %553 = vmatpush1.msra.mxu0 0.0
  %554 = vmatprep.subr.mxu0 0.0
  %555 = vmatpush1.msra.mxu0 0.0
  %556 = vmatprep.subr.mxu0 0.0
  %557 = vmatpush1.msra.mxu0 0.0
  %558 = vmatprep.subr.mxu0 0.0
  %559 = vmatpush1.msra.mxu0 0.0
  %560 = vmatprep.subr.mxu0 0.0
  %561 = vmatpush1.msra.mxu0 0.0
  %562 = vmatprep.subr.mxu0 0.0
  %563 = vmatpush1.msra.mxu0 0.0
  %564 = vmatprep.subr.mxu0 0.0
  %565 = vmatpush1.msra.mxu0 0.0
  %566 = vmatprep.subr.mxu0 0.0
  %567 = vmatpush1.msra.mxu0 0.0
  %568 = vmatprep.subr.mxu0 0.0
  %569 = vmatpush1.msra.mxu0 0.0
  %570 = vmatprep.subr.mxu0 0.0
  %571 = vmatpush1.msra.mxu0 0.0
  %572 = vmatprep.subr.mxu0 0.0
  %573 = vmatpush1.msra.mxu0 0.0
  %574 = vmatprep.subr.mxu0 0.0
  %575 = vmatpush1.msra.mxu0 0.0
  %576 = vmatprep.subr.mxu0 0.0
  %577 = vmatpush1.msra.mxu0 0.0
  %578 = vmatprep.subr.mxu0 0.0
  %579 = vmatpush1.msra.mxu0 0.0
  %580 = vmatprep.subr.mxu0 0.0
  %581 = vmatpush1.msra.mxu0 0.0
  %582 = vmatprep.subr.mxu0 0.0
  %583 = vmatpush1.msra.mxu0 0.0
  %584 = vmatprep.subr.mxu0 0.0
  %585 = vmatpush1.msra.mxu0 0.0
  %586 = vmatprep.mubr.f32.mxu0 0.0
  %587 = vmatmul.mubr.f32.gmra.mrb[0].mxu0 %v520
  %v588 = vpop.f32.mrb[0].mxu0
  %v589 = vadd.f32 %v243, %v588
  %v590 = vpop.f32.mrb[0].mxu0
  %591 = vdwg.mxu0
  %593 = vrot.lane.b32.xlu0 %v414, 64
  %v594 = vpop.permute.xlu0 %593
  %v595 = vsel %vm140, %v594, 0
  %597 = vmatprep.subr.mxu0 0.0
  %598 = vmatpush1.msra.mxu0 %v46
  %599 = vmatprep.subr.mxu0 0.0
  %600 = vmatpush1.msra.mxu0 %v47
  %601 = vmatprep.subr.mxu0 0.0
  %602 = vmatpush1.msra.mxu0 %v48
  %603 = vmatprep.subr.mxu0 0.0
  %604 = vmatpush1.msra.mxu0 %v49
  %605 = vmatprep.subr.mxu0 0.0
  %606 = vmatpush1.msra.mxu0 0.0
  %607 = vmatprep.subr.mxu0 0.0
  %608 = vmatpush1.msra.mxu0 0.0
  %609 = vmatprep.subr.mxu0 0.0
  %610 = vmatpush1.msra.mxu0 0.0
  %611 = vmatprep.subr.mxu0 0.0
  %612 = vmatpush1.msra.mxu0 0.0
  %613 = vmatprep.subr.mxu0 0.0
  %614 = vmatpush1.msra.mxu0 0.0
  %615 = vmatprep.subr.mxu0 0.0
  %616 = vmatpush1.msra.mxu0 0.0
  %617 = vmatprep.subr.mxu0 0.0
  %618 = vmatpush1.msra.mxu0 0.0
  %619 = vmatprep.subr.mxu0 0.0
  %620 = vmatpush1.msra.mxu0 0.0
  %621 = vmatprep.subr.mxu0 0.0
  %622 = vmatpush1.msra.mxu0 0.0
  %623 = vmatprep.subr.mxu0 0.0
  %624 = vmatpush1.msra.mxu0 0.0
  %625 = vmatprep.subr.mxu0 0.0
  %626 = vmatpush1.msra.mxu0 0.0
  %627 = vmatprep.subr.mxu0 0.0
  %628 = vmatpush1.msra.mxu0 0.0
  %629 = vmatprep.subr.mxu0 0.0
  %630 = vmatpush1.msra.mxu0 0.0
  %631 = vmatprep.subr.mxu0 0.0
  %632 = vmatpush1.msra.mxu0 0.0
  %633 = vmatprep.subr.mxu0 0.0
  %634 = vmatpush1.msra.mxu0 0.0
  %635 = vmatprep.subr.mxu0 0.0
  %636 = vmatpush1.msra.mxu0 0.0
  %637 = vmatprep.subr.mxu0 0.0
  %638 = vmatpush1.msra.mxu0 0.0
  %639 = vmatprep.subr.mxu0 0.0
  %640 = vmatpush1.msra.mxu0 0.0
  %641 = vmatprep.subr.mxu0 0.0
  %642 = vmatpush1.msra.mxu0 0.0
  %643 = vmatprep.subr.mxu0 0.0
  %644 = vmatpush1.msra.mxu0 0.0
  %645 = vmatprep.subr.mxu0 0.0
  %646 = vmatpush1.msra.mxu0 0.0
  %647 = vmatprep.subr.mxu0 0.0
  %648 = vmatpush1.msra.mxu0 0.0
  %649 = vmatprep.subr.mxu0 0.0
  %650 = vmatpush1.msra.mxu0 0.0
  %651 = vmatprep.subr.mxu0 0.0
  %652 = vmatpush1.msra.mxu0 0.0
  %653 = vmatprep.subr.mxu0 0.0
  %654 = vmatpush1.msra.mxu0 0.0
  %655 = vmatprep.subr.mxu0 0.0
  %656 = vmatpush1.msra.mxu0 0.0
  %657 = vmatprep.subr.mxu0 0.0
  %658 = vmatpush1.msra.mxu0 0.0
  %659 = vmatprep.subr.mxu0 0.0
  %660 = vmatpush1.msra.mxu0 0.0
  %661 = vmatprep.mubr.f32.mxu0 0.0
  %662 = vmatmul.mubr.f32.gmra.mrb[0].mxu0 %v595
  %v663 = vpop.f32.mrb[0].mxu0
  %v664 = vadd.f32 0.0, %v663
  %v665 = vpop.f32.mrb[0].mxu0
  %666 = vdwg.mxu0
  %v667 = vadd.f32 %v589, %v664
  %v668 = vxor.u32 %v667, 2147483648
  %v669 = vmul.f32 %v668, 1.442695
  %v670 = vpow.pop %v669
  %v671 = vadd.f32 %v670, 1.0
  %v672 = vrcp.pop %v671
  %v673 = vmul.f32 1.0, %v672
  %v674 = vtanh.pop %v667
  %v675 = vmul.f32 %v673, %v408
  %677 = vrot.lane.b32.xlu0 %v674, 32
  %v678 = vpop.permute.xlu0 %677
  %v680 = vmul.f32 %v673, %v678
  %682 = vrot.lane.b32.xlu0 %v680, 32
  %v683 = vpop.permute.xlu0 %682
  %v685 = vadd.f32 %v675, %v683
  %v686 = vtanh.pop %v685
  %688 = vrot.lane.b32.xlu0 %v686, 32
  %v689 = vpop.permute.xlu0 %688
  %v691 = vmul.f32 %v673, %v689
  %692 = vmatprep.subr.mxu0 0.0
  %693 = vmatpush1.msra.mxu0 %v42
  %694 = vmatprep.subr.mxu0 0.0
  %695 = vmatpush1.msra.mxu0 %v43
  %696 = vmatprep.subr.mxu0 0.0
  %697 = vmatpush1.msra.mxu0 %v44
  %698 = vmatprep.subr.mxu0 0.0
  %699 = vmatpush1.msra.mxu0 %v45
  %700 = vmatprep.subr.mxu0 0.0
  %701 = vmatpush1.msra.mxu0 0.0
  %702 = vmatprep.subr.mxu0 0.0
  %703 = vmatpush1.msra.mxu0 0.0
  %704 = vmatprep.subr.mxu0 0.0
  %705 = vmatpush1.msra.mxu0 0.0
  %706 = vmatprep.subr.mxu0 0.0
  %707 = vmatpush1.msra.mxu0 0.0
  %708 = vmatprep.subr.mxu0 0.0
  %709 = vmatpush1.msra.mxu0 0.0
  %710 = vmatprep.subr.mxu0 0.0
  %711 = vmatpush1.msra.mxu0 0.0
  %712 = vmatprep.subr.mxu0 0.0
  %713 = vmatpush1.msra.mxu0 0.0
  %714 = vmatprep.subr.mxu0 0.0
  %715 = vmatpush1.msra.mxu0 0.0
  %716 = vmatprep.subr.mxu0 0.0
  %717 = vmatpush1.msra.mxu0 0.0
  %718 = vmatprep.subr.mxu0 0.0
  %719 = vmatpush1.msra.mxu0 0.0
  %720 = vmatprep.subr.mxu0 0.0
  %721 = vmatpush1.msra.mxu0 0.0
  %722 = vmatprep.subr.mxu0 0.0
  %723 = vmatpush1.msra.mxu0 0.0
  %724 = vmatprep.subr.mxu0 0.0
  %725 = vmatpush1.msra.mxu0 0.0
  %726 = vmatprep.subr.mxu0 0.0
  %727 = vmatpush1.msra.mxu0 0.0
  %728 = vmatprep.subr.mxu0 0.0
  %729 = vmatpush1.msra.mxu0 0.0
  %730 = vmatprep.subr.mxu0 0.0
  %731 = vmatpush1.msra.mxu0 0.0
  %732 = vmatprep.subr.mxu0 0.0
  %733 = vmatpush1.msra.mxu0 0.0
  %734 = vmatprep.subr.mxu0 0.0
  %735 = vmatpush1.msra.mxu0 0.0
  %736 = vmatprep.subr.mxu0 0.0
  %737 = vmatpush1.msra.mxu0 0.0
  %738 = vmatprep.subr.mxu0 0.0
  %739 = vmatpush1.msra.mxu0 0.0
  %740 = vmatprep.subr.mxu0 0.0
  %741 = vmatpush1.msra.mxu0 0.0
  %742 = vmatprep.subr.mxu0 0.0
  %743 = vmatpush1.msra.mxu0 0.0
  %744 = vmatprep.subr.mxu0 0.0
  %745 = vmatpush1.msra.mxu0 0.0
  %746 = vmatprep.subr.mxu0 0.0
  %747 = vmatpush1.msra.mxu0 0.0
  %748 = vmatprep.subr.mxu0 0.0
  %749 = vmatpush1.msra.mxu0 0.0
  %750 = vmatprep.subr.mxu0 0.0
  %751 = vmatpush1.msra.mxu0 0.0
  %752 = vmatprep.subr.mxu0 0.0
  %753 = vmatpush1.msra.mxu0 0.0
  %754 = vmatprep.subr.mxu0 0.0
  %755 = vmatpush1.msra.mxu0 0.0
  %756 = vmatprep.mubr.f32.mxu0 0.0
  %757 = vmatmul.mubr.f32.gmra.mrb[0].mxu0 %v520
  %v758 = vpop.f32.mrb[0].mxu0
  %v759 = vadd.f32 0.0, %v758
  %v760 = vpop.f32.mrb[0].mxu0
  %761 = vdwg.mxu0
  %v763 = vrot.slane %v759, 4
  %v765 = vadd.f32 %v132, %v763
  %v766 = vxor.u32 %v765, 2147483648
  %v767 = vmul.f32 %v766, 1.442695
  %v768 = vpow.pop %v767
  %v769 = vadd.f32 %v768, 1.0
  %v770 = vrcp.pop %v769
  %v771 = vmul.f32 1.0, %v770
  %v772 = vtanh.pop %v765
  %v774 = vrot.slane %v509, 6
  %v776 = vmul.f32 %v771, %v774
  %778 = vrot.lane.b32.xlu0 %v772, 32
  %v779 = vpop.permute.xlu0 %778
  %v781 = vmul.f32 %v771, %v779
  %783 = vrot.lane.b32.xlu0 %v781, 32
  %v784 = vpop.permute.xlu0 %783
  %v786 = vadd.f32 %v776, %v784
  %v787 = vtanh.pop %v786
  %789 = vrot.lane.b32.xlu0 %v787, 32
  %v790 = vpop.permute.xlu0 %789
  %v792 = vmul.f32 %v771, %v790
  %v794 = vrot.slane %v792, 4
  %795 = vrot.lane.b32.xlu0 %v794, 64
  %v796 = vpop.permute.xlu0 %795
  %v797 = vsel %vm140, %v796, 0
  %799 = vmatprep.subr.mxu0 0.0
  %800 = vmatpush1.msra.mxu0 %v38
  %801 = vmatprep.subr.mxu0 0.0
  %802 = vmatpush1.msra.mxu0 %v39
  %803 = vmatprep.subr.mxu0 0.0
  %804 = vmatpush1.msra.mxu0 %v40
  %805 = vmatprep.subr.mxu0 0.0
  %806 = vmatpush1.msra.mxu0 %v41
  %807 = vmatprep.subr.mxu0 0.0
  %808 = vmatpush1.msra.mxu0 0.0
  %809 = vmatprep.subr.mxu0 0.0
  %810 = vmatpush1.msra.mxu0 0.0
  %811 = vmatprep.subr.mxu0 0.0
  %812 = vmatpush1.msra.mxu0 0.0
  %813 = vmatprep.subr.mxu0 0.0
  %814 = vmatpush1.msra.mxu0 0.0
  %815 = vmatprep.subr.mxu0 0.0
  %816 = vmatpush1.msra.mxu0 0.0
  %817 = vmatprep.subr.mxu0 0.0
  %818 = vmatpush1.msra.mxu0 0.0
  %819 = vmatprep.subr.mxu0 0.0
  %820 = vmatpush1.msra.mxu0 0.0
  %821 = vmatprep.subr.mxu0 0.0
  %822 = vmatpush1.msra.mxu0 0.0
  %823 = vmatprep.subr.mxu0 0.0
  %824 = vmatpush1.msra.mxu0 0.0
  %825 = vmatprep.subr.mxu0 0.0
  %826 = vmatpush1.msra.mxu0 0.0
  %827 = vmatprep.subr.mxu0 0.0
  %828 = vmatpush1.msra.mxu0 0.0
  %829 = vmatprep.subr.mxu0 0.0
  %830 = vmatpush1.msra.mxu0 0.0
  %831 = vmatprep.subr.mxu0 0.0
  %832 = vmatpush1.msra.mxu0 0.0
  %833 = vmatprep.subr.mxu0 0.0
  %834 = vmatpush1.msra.mxu0 0.0
  %835 = vmatprep.subr.mxu0 0.0
  %836 = vmatpush1.msra.mxu0 0.0
  %837 = vmatprep.subr.mxu0 0.0
  %838 = vmatpush1.msra.mxu0 0.0
  %839 = vmatprep.subr.mxu0 0.0
  %840 = vmatpush1.msra.mxu0 0.0
  %841 = vmatprep.subr.mxu0 0.0
  %842 = vmatpush1.msra.mxu0 0.0
  %843 = vmatprep.subr.mxu0 0.0
  %844 = vmatpush1.msra.mxu0 0.0
  %845 = vmatprep.subr.mxu0 0.0
  %846 = vmatpush1.msra.mxu0 0.0
  %847 = vmatprep.subr.mxu0 0.0
  %848 = vmatpush1.msra.mxu0 0.0
  %849 = vmatprep.subr.mxu0 0.0
  %850 = vmatpush1.msra.mxu0 0.0
  %851 = vmatprep.subr.mxu0 0.0
  %852 = vmatpush1.msra.mxu0 0.0
  %853 = vmatprep.subr.mxu0 0.0
  %854 = vmatpush1.msra.mxu0 0.0
  %855 = vmatprep.subr.mxu0 0.0
  %856 = vmatpush1.msra.mxu0 0.0
  %857 = vmatprep.subr.mxu0 0.0
  %858 = vmatpush1.msra.mxu0 0.0
  %859 = vmatprep.subr.mxu0 0.0
  %860 = vmatpush1.msra.mxu0 0.0
  %861 = vmatprep.subr.mxu0 0.0
  %862 = vmatpush1.msra.mxu0 0.0
  %863 = vmatprep.mubr.f32.mxu0 0.0
  %864 = vmatmul.mubr.f32.gmra.mrb[0].mxu0 %v797
  %v865 = vpop.f32.mrb[0].mxu0
  %v866 = vadd.f32 %v243, %v865
  %v867 = vpop.f32.mrb[0].mxu0
  %868 = vdwg.mxu0
  %870 = vrot.lane.b32.xlu0 %v691, 64
  %v871 = vpop.permute.xlu0 %870
  %v872 = vsel %vm140, %v871, 0
  %874 = vmatprep.subr.mxu0 0.0
  %875 = vmatpush1.msra.mxu0 %v46
  %876 = vmatprep.subr.mxu0 0.0
  %877 = vmatpush1.msra.mxu0 %v47
  %878 = vmatprep.subr.mxu0 0.0
  %879 = vmatpush1.msra.mxu0 %v48
  %880 = vmatprep.subr.mxu0 0.0
  %881 = vmatpush1.msra.mxu0 %v49
  %882 = vmatprep.subr.mxu0 0.0
  %883 = vmatpush1.msra.mxu0 0.0
  %884 = vmatprep.subr.mxu0 0.0
  %885 = vmatpush1.msra.mxu0 0.0
  %886 = vmatprep.subr.mxu0 0.0
  %887 = vmatpush1.msra.mxu0 0.0
  %888 = vmatprep.subr.mxu0 0.0
  %889 = vmatpush1.msra.mxu0 0.0
  %890 = vmatprep.subr.mxu0 0.0
  %891 = vmatpush1.msra.mxu0 0.0
  %892 = vmatprep.subr.mxu0 0.0
  %893 = vmatpush1.msra.mxu0 0.0
  %894 = vmatprep.subr.mxu0 0.0
  %895 = vmatpush1.msra.mxu0 0.0
  %896 = vmatprep.subr.mxu0 0.0
  %897 = vmatpush1.msra.mxu0 0.0
  %898 = vmatprep.subr.mxu0 0.0
  %899 = vmatpush1.msra.mxu0 0.0
  %900 = vmatprep.subr.mxu0 0.0
  %901 = vmatpush1.msra.mxu0 0.0
  %902 = vmatprep.subr.mxu0 0.0
  %903 = vmatpush1.msra.mxu0 0.0
  %904 = vmatprep.subr.mxu0 0.0
  %905 = vmatpush1.msra.mxu0 0.0
  %906 = vmatprep.subr.mxu0 0.0
  %907 = vmatpush1.msra.mxu0 0.0
  %908 = vmatprep.subr.mxu0 0.0
  %909 = vmatpush1.msra.mxu0 0.0
  %910 = vmatprep.subr.mxu0 0.0
  %911 = vmatpush1.msra.mxu0 0.0
  %912 = vmatprep.subr.mxu0 0.0
  %913 = vmatpush1.msra.mxu0 0.0
  %914 = vmatprep.subr.mxu0 0.0
  %915 = vmatpush1.msra.mxu0 0.0
  %916 = vmatprep.subr.mxu0 0.0
  %917 = vmatpush1.msra.mxu0 0.0
  %918 = vmatprep.subr.mxu0 0.0
  %919 = vmatpush1.msra.mxu0 0.0
  %920 = vmatprep.subr.mxu0 0.0
  %921 = vmatpush1.msra.mxu0 0.0
  %922 = vmatprep.subr.mxu0 0.0
  %923 = vmatpush1.msra.mxu0 0.0
  %924 = vmatprep.subr.mxu0 0.0
  %925 = vmatpush1.msra.mxu0 0.0
  %926 = vmatprep.subr.mxu0 0.0
  %927 = vmatpush1.msra.mxu0 0.0
  %928 = vmatprep.subr.mxu0 0.0
  %929 = vmatpush1.msra.mxu0 0.0
  %930 = vmatprep.subr.mxu0 0.0
  %931 = vmatpush1.msra.mxu0 0.0
  %932 = vmatprep.subr.mxu0 0.0
  %933 = vmatpush1.msra.mxu0 0.0
  %934 = vmatprep.subr.mxu0 0.0
  %935 = vmatpush1.msra.mxu0 0.0
  %936 = vmatprep.subr.mxu0 0.0
  %937 = vmatpush1.msra.mxu0 0.0
  %938 = vmatprep.mubr.f32.mxu0 0.0
  %939 = vmatmul.mubr.f32.gmra.mrb[0].mxu0 %v872
  %v940 = vpop.f32.mrb[0].mxu0
  %v941 = vadd.f32 0.0, %v940
  %v942 = vpop.f32.mrb[0].mxu0
  %943 = vdwg.mxu0
  %v944 = vadd.f32 %v866, %v941
  %v945 = vxor.u32 %v944, 2147483648
  %v946 = vmul.f32 %v945, 1.442695
  %v947 = vpow.pop %v946
  %v948 = vadd.f32 %v947, 1.0
  %v949 = vrcp.pop %v948
  %v950 = vmul.f32 1.0, %v949
  %v951 = vtanh.pop %v944
  %v952 = vmul.f32 %v950, %v685
  %954 = vrot.lane.b32.xlu0 %v951, 32
  %v955 = vpop.permute.xlu0 %954
  %v957 = vmul.f32 %v950, %v955
  %959 = vrot.lane.b32.xlu0 %v957, 32
  %v960 = vpop.permute.xlu0 %959
  %v962 = vadd.f32 %v952, %v960
  %v963 = vtanh.pop %v962
  %965 = vrot.lane.b32.xlu0 %v963, 32
  %v966 = vpop.permute.xlu0 %965
  %v968 = vmul.f32 %v950, %v966
  %969 = vmatprep.subr.mxu0 0.0
  %970 = vmatpush1.msra.mxu0 %v42
  %971 = vmatprep.subr.mxu0 0.0
  %972 = vmatpush1.msra.mxu0 %v43
  %973 = vmatprep.subr.mxu0 0.0
  %974 = vmatpush1.msra.mxu0 %v44
  %975 = vmatprep.subr.mxu0 0.0
  %976 = vmatpush1.msra.mxu0 %v45
  %977 = vmatprep.subr.mxu0 0.0
  %978 = vmatpush1.msra.mxu0 0.0
  %979 = vmatprep.subr.mxu0 0.0
  %980 = vmatpush1.msra.mxu0 0.0
  %981 = vmatprep.subr.mxu0 0.0
  %982 = vmatpush1.msra.mxu0 0.0
  %983 = vmatprep.subr.mxu0 0.0
  %984 = vmatpush1.msra.mxu0 0.0
  %985 = vmatprep.subr.mxu0 0.0
  %986 = vmatpush1.msra.mxu0 0.0
  %987 = vmatprep.subr.mxu0 0.0
  %988 = vmatpush1.msra.mxu0 0.0
  %989 = vmatprep.subr.mxu0 0.0
  %990 = vmatpush1.msra.mxu0 0.0
  %991 = vmatprep.subr.mxu0 0.0
  %992 = vmatpush1.msra.mxu0 0.0
  %993 = vmatprep.subr.mxu0 0.0
  %994 = vmatpush1.msra.mxu0 0.0
  %995 = vmatprep.subr.mxu0 0.0
  %996 = vmatpush1.msra.mxu0 0.0
  %997 = vmatprep.subr.mxu0 0.0
  %998 = vmatpush1.msra.mxu0 0.0
  %999 = vmatprep.subr.mxu0 0.0
  %1000 = vmatpush1.msra.mxu0 0.0
  %1001 = vmatprep.subr.mxu0 0.0
  %1002 = vmatpush1.msra.mxu0 0.0
  %1003 = vmatprep.subr.mxu0 0.0
  %1004 = vmatpush1.msra.mxu0 0.0
  %1005 = vmatprep.subr.mxu0 0.0
  %1006 = vmatpush1.msra.mxu0 0.0
  %1007 = vmatprep.subr.mxu0 0.0
  %1008 = vmatpush1.msra.mxu0 0.0
  %1009 = vmatprep.subr.mxu0 0.0
  %1010 = vmatpush1.msra.mxu0 0.0
  %1011 = vmatprep.subr.mxu0 0.0
  %1012 = vmatpush1.msra.mxu0 0.0
  %1013 = vmatprep.subr.mxu0 0.0
  %1014 = vmatpush1.msra.mxu0 0.0
  %1015 = vmatprep.subr.mxu0 0.0
  %1016 = vmatpush1.msra.mxu0 0.0
  %1017 = vmatprep.subr.mxu0 0.0
  %1018 = vmatpush1.msra.mxu0 0.0
  %1019 = vmatprep.subr.mxu0 0.0
  %1020 = vmatpush1.msra.mxu0 0.0
  %1021 = vmatprep.subr.mxu0 0.0
  %1022 = vmatpush1.msra.mxu0 0.0
  %1023 = vmatprep.subr.mxu0 0.0
  %1024 = vmatpush1.msra.mxu0 0.0
  %1025 = vmatprep.subr.mxu0 0.0
  %1026 = vmatpush1.msra.mxu0 0.0
  %1027 = vmatprep.subr.mxu0 0.0
  %1028 = vmatpush1.msra.mxu0 0.0
  %1029 = vmatprep.subr.mxu0 0.0
  %1030 = vmatpush1.msra.mxu0 0.0
  %1031 = vmatprep.subr.mxu0 0.0
  %1032 = vmatpush1.msra.mxu0 0.0
  %1033 = vmatprep.mubr.f32.mxu0 0.0
  %1034 = vmatmul.mubr.f32.gmra.mrb[0].mxu0 %v797
  %v1035 = vpop.f32.mrb[0].mxu0
  %v1036 = vadd.f32 0.0, %v1035
  %v1037 = vpop.f32.mrb[0].mxu0
  %1038 = vdwg.mxu0
  %v1040 = vrot.slane %v1036, 2
  %v1042 = vadd.f32 %v132, %v1040
  %v1043 = vxor.u32 %v1042, 2147483648
  %v1044 = vmul.f32 %v1043, 1.442695
  %v1045 = vpow.pop %v1044
  %v1046 = vadd.f32 %v1045, 1.0
  %v1047 = vrcp.pop %v1046
  %v1048 = vmul.f32 1.0, %v1047
  %v1049 = vtanh.pop %v1042
  %v1051 = vrot.slane %v786, 6
  %v1053 = vmul.f32 %v1048, %v1051
  %1055 = vrot.lane.b32.xlu0 %v1049, 32
  %v1056 = vpop.permute.xlu0 %1055
  %v1058 = vmul.f32 %v1048, %v1056
  %1060 = vrot.lane.b32.xlu0 %v1058, 32
  %v1061 = vpop.permute.xlu0 %1060
  %v1063 = vadd.f32 %v1053, %v1061
  %v1064 = vtanh.pop %v1063
  %1066 = vrot.lane.b32.xlu0 %v1064, 32
  %v1067 = vpop.permute.xlu0 %1066
  %v1069 = vmul.f32 %v1048, %v1067
  %v1071 = vrot.slane %v1069, 6
  %1072 = vrot.lane.b32.xlu0 %v1071, 64
  %v1073 = vpop.permute.xlu0 %1072
  %v1074 = vsel %vm140, %v1073, 0
  %1076 = vmatprep.subr.mxu0 0.0
  %1077 = vmatpush1.msra.mxu0 %v38
  %1078 = vmatprep.subr.mxu0 0.0
  %1079 = vmatpush1.msra.mxu0 %v39
  %1080 = vmatprep.subr.mxu0 0.0
  %1081 = vmatpush1.msra.mxu0 %v40
  %1082 = vmatprep.subr.mxu0 0.0
  %1083 = vmatpush1.msra.mxu0 %v41
  %1084 = vmatprep.subr.mxu0 0.0
  %1085 = vmatpush1.msra.mxu0 0.0
  %1086 = vmatprep.subr.mxu0 0.0
  %1087 = vmatpush1.msra.mxu0 0.0
  %1088 = vmatprep.subr.mxu0 0.0
  %1089 = vmatpush1.msra.mxu0 0.0
  %1090 = vmatprep.subr.mxu0 0.0
  %1091 = vmatpush1.msra.mxu0 0.0
  %1092 = vmatprep.subr.mxu0 0.0
  %1093 = vmatpush1.msra.mxu0 0.0
  %1094 = vmatprep.subr.mxu0 0.0
  %1095 = vmatpush1.msra.mxu0 0.0
  %1096 = vmatprep.subr.mxu0 0.0
  %1097 = vmatpush1.msra.mxu0 0.0
  %1098 = vmatprep.subr.mxu0 0.0
  %1099 = vmatpush1.msra.mxu0 0.0
  %1100 = vmatprep.subr.mxu0 0.0
  %1101 = vmatpush1.msra.mxu0 0.0
  %1102 = vmatprep.subr.mxu0 0.0
  %1103 = vmatpush1.msra.mxu0 0.0
  %1104 = vmatprep.subr.mxu0 0.0
  %1105 = vmatpush1.msra.mxu0 0.0
  %1106 = vmatprep.subr.mxu0 0.0
  %1107 = vmatpush1.msra.mxu0 0.0
  %1108 = vmatprep.subr.mxu0 0.0
  %1109 = vmatpush1.msra.mxu0 0.0
  %1110 = vmatprep.subr.mxu0 0.0
  %1111 = vmatpush1.msra.mxu0 0.0
  %1112 = vmatprep.subr.mxu0 0.0
  %1113 = vmatpush1.msra.mxu0 0.0
  %1114 = vmatprep.subr.mxu0 0.0
  %1115 = vmatpush1.msra.mxu0 0.0
  %1116 = vmatprep.subr.mxu0 0.0
  %1117 = vmatpush1.msra.mxu0 0.0
  %1118 = vmatprep.subr.mxu0 0.0
  %1119 = vmatpush1.msra.mxu0 0.0
  %1120 = vmatprep.subr.mxu0 0.0
  %1121 = vmatpush1.msra.mxu0 0.0
  %1122 = vmatprep.subr.mxu0 0.0
  %1123 = vmatpush1.msra.mxu0 0.0
  %1124 = vmatprep.subr.mxu0 0.0
  %1125 = vmatpush1.msra.mxu0 0.0
  %1126 = vmatprep.subr.mxu0 0.0
  %1127 = vmatpush1.msra.mxu0 0.0
  %1128 = vmatprep.subr.mxu0 0.0
  %1129 = vmatpush1.msra.mxu0 0.0
  %1130 = vmatprep.subr.mxu0 0.0
  %1131 = vmatpush1.msra.mxu0 0.0
  %1132 = vmatprep.subr.mxu0 0.0
  %1133 = vmatpush1.msra.mxu0 0.0
  %1134 = vmatprep.subr.mxu0 0.0
  %1135 = vmatpush1.msra.mxu0 0.0
  %1136 = vmatprep.subr.mxu0 0.0
  %1137 = vmatpush1.msra.mxu0 0.0
  %1138 = vmatprep.subr.mxu0 0.0
  %1139 = vmatpush1.msra.mxu0 0.0
  %1140 = vmatprep.mubr.f32.mxu0 0.0
  %1141 = vmatmul.mubr.f32.gmra.mrb[0].mxu0 %v1074
  %v1142 = vpop.f32.mrb[0].mxu0
  %v1143 = vadd.f32 %v243, %v1142
  %v1144 = vpop.f32.mrb[0].mxu0
  %1145 = vdwg.mxu0
  %1147 = vrot.lane.b32.xlu0 %v968, 64
  %v1148 = vpop.permute.xlu0 %1147
  %v1149 = vsel %vm140, %v1148, 0
  %1151 = vmatprep.subr.mxu0 0.0
  %1152 = vmatpush1.msra.mxu0 %v46
  %1153 = vmatprep.subr.mxu0 0.0
  %1154 = vmatpush1.msra.mxu0 %v47
  %1155 = vmatprep.subr.mxu0 0.0
  %1156 = vmatpush1.msra.mxu0 %v48
  %1157 = vmatprep.subr.mxu0 0.0
  %1158 = vmatpush1.msra.mxu0 %v49
  %1159 = vmatprep.subr.mxu0 0.0
  %1160 = vmatpush1.msra.mxu0 0.0
  %1161 = vmatprep.subr.mxu0 0.0
  %1162 = vmatpush1.msra.mxu0 0.0
  %1163 = vmatprep.subr.mxu0 0.0
  %1164 = vmatpush1.msra.mxu0 0.0
  %1165 = vmatprep.subr.mxu0 0.0
  %1166 = vmatpush1.msra.mxu0 0.0
  %1167 = vmatprep.subr.mxu0 0.0
  %1168 = vmatpush1.msra.mxu0 0.0
  %1169 = vmatprep.subr.mxu0 0.0
  %1170 = vmatpush1.msra.mxu0 0.0
  %1171 = vmatprep.subr.mxu0 0.0
  %1172 = vmatpush1.msra.mxu0 0.0
  %1173 = vmatprep.subr.mxu0 0.0
  %1174 = vmatpush1.msra.mxu0 0.0
  %1175 = vmatprep.subr.mxu0 0.0
  %1176 = vmatpush1.msra.mxu0 0.0
  %1177 = vmatprep.subr.mxu0 0.0
  %1178 = vmatpush1.msra.mxu0 0.0
  %1179 = vmatprep.subr.mxu0 0.0
  %1180 = vmatpush1.msra.mxu0 0.0
  %1181 = vmatprep.subr.mxu0 0.0
  %1182 = vmatpush1.msra.mxu0 0.0
  %1183 = vmatprep.subr.mxu0 0.0
  %1184 = vmatpush1.msra.mxu0 0.0
  %1185 = vmatprep.subr.mxu0 0.0
  %1186 = vmatpush1.msra.mxu0 0.0
  %1187 = vmatprep.subr.mxu0 0.0
  %1188 = vmatpush1.msra.mxu0 0.0
  %1189 = vmatprep.subr.mxu0 0.0
  %1190 = vmatpush1.msra.mxu0 0.0
  %1191 = vmatprep.subr.mxu0 0.0
  %1192 = vmatpush1.msra.mxu0 0.0
  %1193 = vmatprep.subr.mxu0 0.0
  %1194 = vmatpush1.msra.mxu0 0.0
  %1195 = vmatprep.subr.mxu0 0.0
  %1196 = vmatpush1.msra.mxu0 0.0
  %1197 = vmatprep.subr.mxu0 0.0
  %1198 = vmatpush1.msra.mxu0 0.0
  %1199 = vmatprep.subr.mxu0 0.0
  %1200 = vmatpush1.msra.mxu0 0.0
  %1201 = vmatprep.subr.mxu0 0.0
  %1202 = vmatpush1.msra.mxu0 0.0
  %1203 = vmatprep.subr.mxu0 0.0
  %1204 = vmatpush1.msra.mxu0 0.0
  %1205 = vmatprep.subr.mxu0 0.0
  %1206 = vmatpush1.msra.mxu0 0.0
  %1207 = vmatprep.subr.mxu0 0.0
  %1208 = vmatpush1.msra.mxu0 0.0
  %1209 = vmatprep.subr.mxu0 0.0
  %1210 = vmatpush1.msra.mxu0 0.0
  %1211 = vmatprep.subr.mxu0 0.0
  %1212 = vmatpush1.msra.mxu0 0.0
  %1213 = vmatprep.subr.mxu0 0.0
  %1214 = vmatpush1.msra.mxu0 0.0
  %1215 = vmatprep.mubr.f32.mxu0 0.0
  %1216 = vmatmul.mubr.f32.gmra.mrb[0].mxu0 %v1149
  %v1217 = vpop.f32.mrb[0].mxu0
  %v1218 = vadd.f32 0.0, %v1217
  %v1219 = vpop.f32.mrb[0].mxu0
  %1220 = vdwg.mxu0
  %v1221 = vadd.f32 %v1143, %v1218
  %v1222 = vxor.u32 %v1221, 2147483648
  %v1223 = vmul.f32 %v1222, 1.442695
  %v1224 = vpow.pop %v1223
  %v1225 = vadd.f32 %v1224, 1.0
  %v1226 = vrcp.pop %v1225
  %v1227 = vmul.f32 1.0, %v1226
  %v1228 = vtanh.pop %v1221
  %v1229 = vmul.f32 %v1227, %v962
  %1231 = vrot.lane.b32.xlu0 %v1228, 32
  %v1232 = vpop.permute.xlu0 %1231
  %v1234 = vmul.f32 %v1227, %v1232
  %1236 = vrot.lane.b32.xlu0 %v1234, 32
  %v1237 = vpop.permute.xlu0 %1236
  %v1239 = vadd.f32 %v1229, %v1237
  %v1240 = vtanh.pop %v1239
  %1242 = vrot.lane.b32.xlu0 %v1240, 32
  %v1243 = vpop.permute.xlu0 %1242
  %v1245 = vmul.f32 %v1227, %v1243
  %1246 = vmatprep.subr.mxu0 0.0
  %1247 = vmatpush1.msra.mxu0 %v42
  %1248 = vmatprep.subr.mxu0 0.0
  %1249 = vmatpush1.msra.mxu0 %v43
  %1250 = vmatprep.subr.mxu0 0.0
  %1251 = vmatpush1.msra.mxu0 %v44
  %1252 = vmatprep.subr.mxu0 0.0
  %1253 = vmatpush1.msra.mxu0 %v45
  %1254 = vmatprep.subr.mxu0 0.0
  %1255 = vmatpush1.msra.mxu0 0.0
  %1256 = vmatprep.subr.mxu0 0.0
  %1257 = vmatpush1.msra.mxu0 0.0
  %1258 = vmatprep.subr.mxu0 0.0
  %1259 = vmatpush1.msra.mxu0 0.0
  %1260 = vmatprep.subr.mxu0 0.0
  %1261 = vmatpush1.msra.mxu0 0.0
  %1262 = vmatprep.subr.mxu0 0.0
  %1263 = vmatpush1.msra.mxu0 0.0
  %1264 = vmatprep.subr.mxu0 0.0
  %1265 = vmatpush1.msra.mxu0 0.0
  %1266 = vmatprep.subr.mxu0 0.0
  %1267 = vmatpush1.msra.mxu0 0.0
  %1268 = vmatprep.subr.mxu0 0.0
  %1269 = vmatpush1.msra.mxu0 0.0
  %1270 = vmatprep.subr.mxu0 0.0
  %1271 = vmatpush1.msra.mxu0 0.0
  %1272 = vmatprep.subr.mxu0 0.0
  %1273 = vmatpush1.msra.mxu0 0.0
  %1274 = vmatprep.subr.mxu0 0.0
  %1275 = vmatpush1.msra.mxu0 0.0
  %1276 = vmatprep.subr.mxu0 0.0
  %1277 = vmatpush1.msra.mxu0 0.0
  %1278 = vmatprep.subr.mxu0 0.0
  %1279 = vmatpush1.msra.mxu0 0.0
  %1280 = vmatprep.subr.mxu0 0.0
  %1281 = vmatpush1.msra.mxu0 0.0
  %1282 = vmatprep.subr.mxu0 0.0
  %1283 = vmatpush1.msra.mxu0 0.0
  %1284 = vmatprep.subr.mxu0 0.0
  %1285 = vmatpush1.msra.mxu0 0.0
  %1286 = vmatprep.subr.mxu0 0.0
  %1287 = vmatpush1.msra.mxu0 0.0
  %1288 = vmatprep.subr.mxu0 0.0
  %1289 = vmatpush1.msra.mxu0 0.0
  %1290 = vmatprep.subr.mxu0 0.0
  %1291 = vmatpush1.msra.mxu0 0.0
  %1292 = vmatprep.subr.mxu0 0.0
  %1293 = vmatpush1.msra.mxu0 0.0
  %1294 = vmatprep.subr.mxu0 0.0
  %1295 = vmatpush1.msra.mxu0 0.0
  %1296 = vmatprep.subr.mxu0 0.0
  %1297 = vmatpush1.msra.mxu0 0.0
  %1298 = vmatprep.subr.mxu0 0.0
  %1299 = vmatpush1.msra.mxu0 0.0
  %1300 = vmatprep.subr.mxu0 0.0
  %1301 = vmatpush1.msra.mxu0 0.0
  %1302 = vmatprep.subr.mxu0 0.0
  %1303 = vmatpush1.msra.mxu0 0.0
  %1304 = vmatprep.subr.mxu0 0.0
  %1305 = vmatpush1.msra.mxu0 0.0
  %1306 = vmatprep.subr.mxu0 0.0
  %1307 = vmatpush1.msra.mxu0 0.0
  %1308 = vmatprep.subr.mxu0 0.0
  %1309 = vmatpush1.msra.mxu0 0.0
  %1310 = vmatprep.mubr.f32.mxu0 0.0
  %1311 = vmatmul.mubr.f32.gmra.mrb[0].mxu0 %v1074
  %v1312 = vpop.f32.mrb[0].mxu0
  %v1313 = vadd.f32 0.0, %v1312
  %v1314 = vpop.f32.mrb[0].mxu0
  %1315 = vdwg.mxu0
  %v1316 = vadd.f32 %v137, %v1313
  %v1317 = vxor.u32 %v1316, 2147483648
  %v1318 = vmul.f32 %v1317, 1.442695
  %v1319 = vpow.pop %v1318
  %v1320 = vadd.f32 %v1319, 1.0
  %v1321 = vrcp.pop %v1320
  %v1322 = vmul.f32 1.0, %v1321
  %v1323 = vtanh.pop %v1316
  %v1325 = vrot.slane %v1063, 6
  %v1327 = vmul.f32 %v1322, %v1325
  %1329 = vrot.lane.b32.xlu0 %v1323, 32
  %v1330 = vpop.permute.xlu0 %1329
  %v1332 = vmul.f32 %v1322, %v1330
  %1334 = vrot.lane.b32.xlu0 %v1332, 32
  %v1335 = vpop.permute.xlu0 %1334
  %v1337 = vadd.f32 %v1327, %v1335
  %v1338 = vtanh.pop %v1337
  %1340 = vrot.lane.b32.xlu0 %v1338, 32
  %v1341 = vpop.permute.xlu0 %1340
  %v1343 = vmul.f32 %v1322, %v1341
  %1345 = vrot.lane.b32.xlu0 %v1343, 64
  %v1346 = vpop.permute.xlu0 %1345
  %v1347 = vsel %vm140, %v1346, 0
  %1349 = vmatprep.subr.mxu0 0.0
  %1350 = vmatpush1.msra.mxu0 %v38
  %1351 = vmatprep.subr.mxu0 0.0
  %1352 = vmatpush1.msra.mxu0 %v39
  %1353 = vmatprep.subr.mxu0 0.0
  %1354 = vmatpush1.msra.mxu0 %v40
  %1355 = vmatprep.subr.mxu0 0.0
  %1356 = vmatpush1.msra.mxu0 %v41
  %1357 = vmatprep.subr.mxu0 0.0
  %1358 = vmatpush1.msra.mxu0 0.0
  %1359 = vmatprep.subr.mxu0 0.0
  %1360 = vmatpush1.msra.mxu0 0.0
  %1361 = vmatprep.subr.mxu0 0.0
  %1362 = vmatpush1.msra.mxu0 0.0
  %1363 = vmatprep.subr.mxu0 0.0
  %1364 = vmatpush1.msra.mxu0 0.0
  %1365 = vmatprep.subr.mxu0 0.0
  %1366 = vmatpush1.msra.mxu0 0.0
  %1367 = vmatprep.subr.mxu0 0.0
  %1368 = vmatpush1.msra.mxu0 0.0
  %1369 = vmatprep.subr.mxu0 0.0
  %1370 = vmatpush1.msra.mxu0 0.0
  %1371 = vmatprep.subr.mxu0 0.0
  %1372 = vmatpush1.msra.mxu0 0.0
  %1373 = vmatprep.subr.mxu0 0.0
  %1374 = vmatpush1.msra.mxu0 0.0
  %1375 = vmatprep.subr.mxu0 0.0
  %1376 = vmatpush1.msra.mxu0 0.0
  %1377 = vmatprep.subr.mxu0 0.0
  %1378 = vmatpush1.msra.mxu0 0.0
  %1379 = vmatprep.subr.mxu0 0.0
  %1380 = vmatpush1.msra.mxu0 0.0
  %1381 = vmatprep.subr.mxu0 0.0
  %1382 = vmatpush1.msra.mxu0 0.0
  %1383 = vmatprep.subr.mxu0 0.0
  %1384 = vmatpush1.msra.mxu0 0.0
  %1385 = vmatprep.subr.mxu0 0.0
  %1386 = vmatpush1.msra.mxu0 0.0
  %1387 = vmatprep.subr.mxu0 0.0
  %1388 = vmatpush1.msra.mxu0 0.0
  %1389 = vmatprep.subr.mxu0 0.0
  %1390 = vmatpush1.msra.mxu0 0.0
  %1391 = vmatprep.subr.mxu0 0.0
  %1392 = vmatpush1.msra.mxu0 0.0
  %1393 = vmatprep.subr.mxu0 0.0
  %1394 = vmatpush1.msra.mxu0 0.0
  %1395 = vmatprep.subr.mxu0 0.0
  %1396 = vmatpush1.msra.mxu0 0.0
  %1397 = vmatprep.subr.mxu0 0.0
  %1398 = vmatpush1.msra.mxu0 0.0
  %1399 = vmatprep.subr.mxu0 0.0
  %1400 = vmatpush1.msra.mxu0 0.0
  %1401 = vmatprep.subr.mxu0 0.0
  %1402 = vmatpush1.msra.mxu0 0.0
  %1403 = vmatprep.subr.mxu0 0.0
  %1404 = vmatpush1.msra.mxu0 0.0
  %1405 = vmatprep.subr.mxu0 0.0
  %1406 = vmatpush1.msra.mxu0 0.0
  %1407 = vmatprep.subr.mxu0 0.0
  %1408 = vmatpush1.msra.mxu0 0.0
  %1409 = vmatprep.subr.mxu0 0.0
  %1410 = vmatpush1.msra.mxu0 0.0
  %1411 = vmatprep.subr.mxu0 0.0
  %1412 = vmatpush1.msra.mxu0 0.0
  %1413 = vmatprep.mubr.f32.mxu0 0.0
  %1414 = vmatmul.mubr.f32.gmra.mrb[0].mxu0 %v1347
  %v1415 = vpop.f32.mrb[0].mxu0
  %v1416 = vadd.f32 %v243, %v1415
  %v1417 = vpop.f32.mrb[0].mxu0
  %1418 = vdwg.mxu0
  %1420 = vrot.lane.b32.xlu0 %v1245, 64
  %v1421 = vpop.permute.xlu0 %1420
  %v1422 = vsel %vm140, %v1421, 0
  %1424 = vmatprep.subr.mxu0 0.0
  %1425 = vmatpush1.msra.mxu0 %v46
  %1426 = vmatprep.subr.mxu0 0.0
  %1427 = vmatpush1.msra.mxu0 %v47
  %1428 = vmatprep.subr.mxu0 0.0
  %1429 = vmatpush1.msra.mxu0 %v48
  %1430 = vmatprep.subr.mxu0 0.0
  %1431 = vmatpush1.msra.mxu0 %v49
  %1432 = vmatprep.subr.mxu0 0.0
  %1433 = vmatpush1.msra.mxu0 0.0
  %1434 = vmatprep.subr.mxu0 0.0
  %1435 = vmatpush1.msra.mxu0 0.0
  %1436 = vmatprep.subr.mxu0 0.0
  %1437 = vmatpush1.msra.mxu0 0.0
  %1438 = vmatprep.subr.mxu0 0.0
  %1439 = vmatpush1.msra.mxu0 0.0
  %1440 = vmatprep.subr.mxu0 0.0
  %1441 = vmatpush1.msra.mxu0 0.0
  %1442 = vmatprep.subr.mxu0 0.0
  %1443 = vmatpush1.msra.mxu0 0.0
  %1444 = vmatprep.subr.mxu0 0.0
  %1445 = vmatpush1.msra.mxu0 0.0
  %1446 = vmatprep.subr.mxu0 0.0
  %1447 = vmatpush1.msra.mxu0 0.0
  %1448 = vmatprep.subr.mxu0 0.0
  %1449 = vmatpush1.msra.mxu0 0.0
  %1450 = vmatprep.subr.mxu0 0.0
  %1451 = vmatpush1.msra.mxu0 0.0
  %1452 = vmatprep.subr.mxu0 0.0
  %1453 = vmatpush1.msra.mxu0 0.0
  %1454 = vmatprep.subr.mxu0 0.0
  %1455 = vmatpush1.msra.mxu0 0.0
  %1456 = vmatprep.subr.mxu0 0.0
  %1457 = vmatpush1.msra.mxu0 0.0
  %1458 = vmatprep.subr.mxu0 0.0
  %1459 = vmatpush1.msra.mxu0 0.0
  %1460 = vmatprep.subr.mxu0 0.0
  %1461 = vmatpush1.msra.mxu0 0.0
  %1462 = vmatprep.subr.mxu0 0.0
  %1463 = vmatpush1.msra.mxu0 0.0
  %1464 = vmatprep.subr.mxu0 0.0
  %1465 = vmatpush1.msra.mxu0 0.0
  %1466 = vmatprep.subr.mxu0 0.0
  %1467 = vmatpush1.msra.mxu0 0.0
  %1468 = vmatprep.subr.mxu0 0.0
  %1469 = vmatpush1.msra.mxu0 0.0
  %1470 = vmatprep.subr.mxu0 0.0
  %1471 = vmatpush1.msra.mxu0 0.0
  %1472 = vmatprep.subr.mxu0 0.0
  %1473 = vmatpush1.msra.mxu0 0.0
  %1474 = vmatprep.subr.mxu0 0.0
  %1475 = vmatpush1.msra.mxu0 0.0
  %1476 = vmatprep.subr.mxu0 0.0
  %1477 = vmatpush1.msra.mxu0 0.0
  %1478 = vmatprep.subr.mxu0 0.0
  %1479 = vmatpush1.msra.mxu0 0.0
  %1480 = vmatprep.subr.mxu0 0.0
  %1481 = vmatpush1.msra.mxu0 0.0
  %1482 = vmatprep.subr.mxu0 0.0
  %1483 = vmatpush1.msra.mxu0 0.0
  %1484 = vmatprep.subr.mxu0 0.0
  %1485 = vmatpush1.msra.mxu0 0.0
  %1486 = vmatprep.subr.mxu0 0.0
  %1487 = vmatpush1.msra.mxu0 0.0
  %1488 = vmatprep.mubr.f32.mxu0 0.0
  %1489 = vmatmul.mubr.f32.gmra.mrb[0].mxu0 %v1422
  %v1490 = vpop.f32.mrb[0].mxu0
  %v1491 = vadd.f32 0.0, %v1490
  %v1492 = vpop.f32.mrb[0].mxu0
  %1493 = vdwg.mxu0
  %v1494 = vadd.f32 %v1416, %v1491
  %v1495 = vxor.u32 %v1494, 2147483648
  %v1496 = vmul.f32 %v1495, 1.442695
  %v1497 = vpow.pop %v1496
  %v1498 = vadd.f32 %v1497, 1.0
  %v1499 = vrcp.pop %v1498
  %v1500 = vmul.f32 1.0, %v1499
  %v1501 = vtanh.pop %v1494
  %v1502 = vmul.f32 %v1500, %v1239
  %1504 = vrot.lane.b32.xlu0 %v1501, 32
  %v1505 = vpop.permute.xlu0 %1504
  %v1507 = vmul.f32 %v1500, %v1505
  %1509 = vrot.lane.b32.xlu0 %v1507, 32
  %v1510 = vpop.permute.xlu0 %1509
  %v1512 = vadd.f32 %v1502, %v1510
  %v1513 = vtanh.pop %v1512
  %1515 = vrot.lane.b32.xlu0 %v1513, 32
  %v1516 = vpop.permute.xlu0 %1515
  %v1518 = vmul.f32 %v1500, %v1516
  %1519 = vmatprep.subr.mxu0 0.0
  %1520 = vmatpush1.msra.mxu0 %v42
  %1521 = vmatprep.subr.mxu0 0.0
  %1522 = vmatpush1.msra.mxu0 %v43
  %1523 = vmatprep.subr.mxu0 0.0
  %1524 = vmatpush1.msra.mxu0 %v44
  %1525 = vmatprep.subr.mxu0 0.0
  %1526 = vmatpush1.msra.mxu0 %v45
  %1527 = vmatprep.subr.mxu0 0.0
  %1528 = vmatpush1.msra.mxu0 0.0
  %1529 = vmatprep.subr.mxu0 0.0
  %1530 = vmatpush1.msra.mxu0 0.0
  %1531 = vmatprep.subr.mxu0 0.0
  %1532 = vmatpush1.msra.mxu0 0.0
  %1533 = vmatprep.subr.mxu0 0.0
  %1534 = vmatpush1.msra.mxu0 0.0
  %1535 = vmatprep.subr.mxu0 0.0
  %1536 = vmatpush1.msra.mxu0 0.0
  %1537 = vmatprep.subr.mxu0 0.0
  %1538 = vmatpush1.msra.mxu0 0.0
  %1539 = vmatprep.subr.mxu0 0.0
  %1540 = vmatpush1.msra.mxu0 0.0
  %1541 = vmatprep.subr.mxu0 0.0
  %1542 = vmatpush1.msra.mxu0 0.0
  %1543 = vmatprep.subr.mxu0 0.0
  %1544 = vmatpush1.msra.mxu0 0.0
  %1545 = vmatprep.subr.mxu0 0.0
  %1546 = vmatpush1.msra.mxu0 0.0
  %1547 = vmatprep.subr.mxu0 0.0
  %1548 = vmatpush1.msra.mxu0 0.0
  %1549 = vmatprep.subr.mxu0 0.0
  %1550 = vmatpush1.msra.mxu0 0.0
  %1551 = vmatprep.subr.mxu0 0.0
  %1552 = vmatpush1.msra.mxu0 0.0
  %1553 = vmatprep.subr.mxu0 0.0
  %1554 = vmatpush1.msra.mxu0 0.0
  %1555 = vmatprep.subr.mxu0 0.0
  %1556 = vmatpush1.msra.mxu0 0.0
  %1557 = vmatprep.subr.mxu0 0.0
  %1558 = vmatpush1.msra.mxu0 0.0
  %1559 = vmatprep.subr.mxu0 0.0
  %1560 = vmatpush1.msra.mxu0 0.0
  %1561 = vmatprep.subr.mxu0 0.0
  %1562 = vmatpush1.msra.mxu0 0.0
  %1563 = vmatprep.subr.mxu0 0.0
  %1564 = vmatpush1.msra.mxu0 0.0
  %1565 = vmatprep.subr.mxu0 0.0
  %1566 = vmatpush1.msra.mxu0 0.0
  %1567 = vmatprep.subr.mxu0 0.0
  %1568 = vmatpush1.msra.mxu0 0.0
  %1569 = vmatprep.subr.mxu0 0.0
  %1570 = vmatpush1.msra.mxu0 0.0
  %1571 = vmatprep.subr.mxu0 0.0
  %1572 = vmatpush1.msra.mxu0 0.0
  %1573 = vmatprep.subr.mxu0 0.0
  %1574 = vmatpush1.msra.mxu0 0.0
  %1575 = vmatprep.subr.mxu0 0.0
  %1576 = vmatpush1.msra.mxu0 0.0
  %1577 = vmatprep.subr.mxu0 0.0
  %1578 = vmatpush1.msra.mxu0 0.0
  %1579 = vmatprep.subr.mxu0 0.0
  %1580 = vmatpush1.msra.mxu0 0.0
  %1581 = vmatprep.subr.mxu0 0.0
  %1582 = vmatpush1.msra.mxu0 0.0
  %1583 = vmatprep.mubr.f32.mxu0 0.0
  %1584 = vmatmul.mubr.f32.gmra.mrb[0].mxu0 %v1347
  %v1585 = vpop.f32.mrb[0].mxu0
  %v1586 = vadd.f32 0.0, %v1585
  %v1587 = vpop.f32.mrb[0].mxu0
  %1588 = vdwg.mxu0
  %v1590 = vrot.slane %v1586, 6
  %v1592 = vadd.f32 %v137, %v1590
  %v1593 = vxor.u32 %v1592, 2147483648
  %v1594 = vmul.f32 %v1593, 1.442695
  %v1595 = vpow.pop %v1594
  %v1596 = vadd.f32 %v1595, 1.0
  %v1597 = vrcp.pop %v1596
  %v1598 = vmul.f32 1.0, %v1597
  %v1599 = vtanh.pop %v1592
  %v1601 = vrot.slane %v1337, 6
  %v1603 = vmul.f32 %v1598, %v1601
  %1605 = vrot.lane.b32.xlu0 %v1599, 32
  %v1606 = vpop.permute.xlu0 %1605
  %v1608 = vmul.f32 %v1598, %v1606
  %1610 = vrot.lane.b32.xlu0 %v1608, 32
  %v1611 = vpop.permute.xlu0 %1610
  %v1613 = vadd.f32 %v1603, %v1611
  %v1614 = vtanh.pop %v1613
  %1616 = vrot.lane.b32.xlu0 %v1614, 32
  %v1617 = vpop.permute.xlu0 %1616
  %v1619 = vmul.f32 %v1598, %v1617
  %v1621 = vrot.slane %v1619, 2
  %1622 = vrot.lane.b32.xlu0 %v1621, 64
  %v1623 = vpop.permute.xlu0 %1622
  %v1624 = vsel %vm140, %v1623, 0
  %1626 = vmatprep.subr.mxu0 0.0
  %1627 = vmatpush1.msra.mxu0 %v38
  %1628 = vmatprep.subr.mxu0 0.0
  %1629 = vmatpush1.msra.mxu0 %v39
  %1630 = vmatprep.subr.mxu0 0.0
  %1631 = vmatpush1.msra.mxu0 %v40
  %1632 = vmatprep.subr.mxu0 0.0
  %1633 = vmatpush1.msra.mxu0 %v41
  %1634 = vmatprep.subr.mxu0 0.0
  %1635 = vmatpush1.msra.mxu0 0.0
  %1636 = vmatprep.subr.mxu0 0.0
  %1637 = vmatpush1.msra.mxu0 0.0
  %1638 = vmatprep.subr.mxu0 0.0
  %1639 = vmatpush1.msra.mxu0 0.0
  %1640 = vmatprep.subr.mxu0 0.0
  %1641 = vmatpush1.msra.mxu0 0.0
  %1642 = vmatprep.subr.mxu0 0.0
  %1643 = vmatpush1.msra.mxu0 0.0
  %1644 = vmatprep.subr.mxu0 0.0
  %1645 = vmatpush1.msra.mxu0 0.0
  %1646 = vmatprep.subr.mxu0 0.0
  %1647 = vmatpush1.msra.mxu0 0.0
  %1648 = vmatprep.subr.mxu0 0.0
  %1649 = vmatpush1.msra.mxu0 0.0
  %1650 = vmatprep.subr.mxu0 0.0
  %1651 = vmatpush1.msra.mxu0 0.0
  %1652 = vmatprep.subr.mxu0 0.0
  %1653 = vmatpush1.msra.mxu0 0.0
  %1654 = vmatprep.subr.mxu0 0.0
  %1655 = vmatpush1.msra.mxu0 0.0
  %1656 = vmatprep.subr.mxu0 0.0
  %1657 = vmatpush1.msra.mxu0 0.0
  %1658 = vmatprep.subr.mxu0 0.0
  %1659 = vmatpush1.msra.mxu0 0.0
  %1660 = vmatprep.subr.mxu0 0.0
  %1661 = vmatpush1.msra.mxu0 0.0
  %1662 = vmatprep.subr.mxu0 0.0
  %1663 = vmatpush1.msra.mxu0 0.0
  %1664 = vmatprep.subr.mxu0 0.0
  %1665 = vmatpush1.msra.mxu0 0.0
  %1666 = vmatprep.subr.mxu0 0.0
  %1667 = vmatpush1.msra.mxu0 0.0
  %1668 = vmatprep.subr.mxu0 0.0
  %1669 = vmatpush1.msra.mxu0 0.0
  %1670 = vmatprep.subr.mxu0 0.0
  %1671 = vmatpush1.msra.mxu0 0.0
  %1672 = vmatprep.subr.mxu0 0.0
  %1673 = vmatpush1.msra.mxu0 0.0
  %1674 = vmatprep.subr.mxu0 0.0
  %1675 = vmatpush1.msra.mxu0 0.0
  %1676 = vmatprep.subr.mxu0 0.0
  %1677 = vmatpush1.msra.mxu0 0.0
  %1678 = vmatprep.subr.mxu0 0.0
  %1679 = vmatpush1.msra.mxu0 0.0
  %1680 = vmatprep.subr.mxu0 0.0
  %1681 = vmatpush1.msra.mxu0 0.0
  %1682 = vmatprep.subr.mxu0 0.0
  %1683 = vmatpush1.msra.mxu0 0.0
  %1684 = vmatprep.subr.mxu0 0.0
  %1685 = vmatpush1.msra.mxu0 0.0
  %1686 = vmatprep.subr.mxu0 0.0
  %1687 = vmatpush1.msra.mxu0 0.0
  %1688 = vmatprep.subr.mxu0 0.0
  %1689 = vmatpush1.msra.mxu0 0.0
  %1690 = vmatprep.mubr.f32.mxu0 0.0
  %1691 = vmatmul.mubr.f32.gmra.mrb[0].mxu0 %v1624
  %v1692 = vpop.f32.mrb[0].mxu0
  %v1693 = vadd.f32 %v243, %v1692
  %v1694 = vpop.f32.mrb[0].mxu0
  %1695 = vdwg.mxu0
  %1697 = vrot.lane.b32.xlu0 %v1518, 64
  %v1698 = vpop.permute.xlu0 %1697
  %v1699 = vsel %vm140, %v1698, 0
  %1701 = vmatprep.subr.mxu0 0.0
  %1702 = vmatpush1.msra.mxu0 %v46
  %1703 = vmatprep.subr.mxu0 0.0
  %1704 = vmatpush1.msra.mxu0 %v47
  %1705 = vmatprep.subr.mxu0 0.0
  %1706 = vmatpush1.msra.mxu0 %v48
  %1707 = vmatprep.subr.mxu0 0.0
  %1708 = vmatpush1.msra.mxu0 %v49
  %1709 = vmatprep.subr.mxu0 0.0
  %1710 = vmatpush1.msra.mxu0 0.0
  %1711 = vmatprep.subr.mxu0 0.0
  %1712 = vmatpush1.msra.mxu0 0.0
  %1713 = vmatprep.subr.mxu0 0.0
  %1714 = vmatpush1.msra.mxu0 0.0
  %1715 = vmatprep.subr.mxu0 0.0
  %1716 = vmatpush1.msra.mxu0 0.0
  %1717 = vmatprep.subr.mxu0 0.0
  %1718 = vmatpush1.msra.mxu0 0.0
  %1719 = vmatprep.subr.mxu0 0.0
  %1720 = vmatpush1.msra.mxu0 0.0
  %1721 = vmatprep.subr.mxu0 0.0
  %1722 = vmatpush1.msra.mxu0 0.0
  %1723 = vmatprep.subr.mxu0 0.0
  %1724 = vmatpush1.msra.mxu0 0.0
  %1725 = vmatprep.subr.mxu0 0.0
  %1726 = vmatpush1.msra.mxu0 0.0
  %1727 = vmatprep.subr.mxu0 0.0
  %1728 = vmatpush1.msra.mxu0 0.0
  %1729 = vmatprep.subr.mxu0 0.0
  %1730 = vmatpush1.msra.mxu0 0.0
  %1731 = vmatprep.subr.mxu0 0.0
  %1732 = vmatpush1.msra.mxu0 0.0
  %1733 = vmatprep.subr.mxu0 0.0
  %1734 = vmatpush1.msra.mxu0 0.0
  %1735 = vmatprep.subr.mxu0 0.0
  %1736 = vmatpush1.msra.mxu0 0.0
  %1737 = vmatprep.subr.mxu0 0.0
  %1738 = vmatpush1.msra.mxu0 0.0
  %1739 = vmatprep.subr.mxu0 0.0
  %1740 = vmatpush1.msra.mxu0 0.0
  %1741 = vmatprep.subr.mxu0 0.0
  %1742 = vmatpush1.msra.mxu0 0.0
  %1743 = vmatprep.subr.mxu0 0.0
  %1744 = vmatpush1.msra.mxu0 0.0
  %1745 = vmatprep.subr.mxu0 0.0
  %1746 = vmatpush1.msra.mxu0 0.0
  %1747 = vmatprep.subr.mxu0 0.0
  %1748 = vmatpush1.msra.mxu0 0.0
  %1749 = vmatprep.subr.mxu0 0.0
  %1750 = vmatpush1.msra.mxu0 0.0
  %1751 = vmatprep.subr.mxu0 0.0
  %1752 = vmatpush1.msra.mxu0 0.0
  %1753 = vmatprep.subr.mxu0 0.0
  %1754 = vmatpush1.msra.mxu0 0.0
  %1755 = vmatprep.subr.mxu0 0.0
  %1756 = vmatpush1.msra.mxu0 0.0
  %1757 = vmatprep.subr.mxu0 0.0
  %1758 = vmatpush1.msra.mxu0 0.0
  %1759 = vmatprep.subr.mxu0 0.0
  %1760 = vmatpush1.msra.mxu0 0.0
  %1761 = vmatprep.subr.mxu0 0.0
  %1762 = vmatpush1.msra.mxu0 0.0
  %1763 = vmatprep.subr.mxu0 0.0
  %1764 = vmatpush1.msra.mxu0 0.0
  %1765 = vmatprep.mubr.f32.mxu0 0.0
  %1766 = vmatmul.mubr.f32.gmra.mrb[0].mxu0 %v1699
  %v1767 = vpop.f32.mrb[0].mxu0
  %v1768 = vadd.f32 0.0, %v1767
  %v1769 = vpop.f32.mrb[0].mxu0
  %1770 = vdwg.mxu0
  %v1771 = vadd.f32 %v1693, %v1768
  %v1772 = vxor.u32 %v1771, 2147483648
  %v1773 = vmul.f32 %v1772, 1.442695
  %v1774 = vpow.pop %v1773
  %v1775 = vadd.f32 %v1774, 1.0
  %v1776 = vrcp.pop %v1775
  %v1777 = vmul.f32 1.0, %v1776
  %v1778 = vtanh.pop %v1771
  %v1779 = vmul.f32 %v1777, %v1512
  %1781 = vrot.lane.b32.xlu0 %v1778, 32
  %v1782 = vpop.permute.xlu0 %1781
  %v1784 = vmul.f32 %v1777, %v1782
  %1786 = vrot.lane.b32.xlu0 %v1784, 32
  %v1787 = vpop.permute.xlu0 %1786
  %v1789 = vadd.f32 %v1779, %v1787
  %v1790 = vtanh.pop %v1789
  %1792 = vrot.lane.b32.xlu0 %v1790, 32
  %v1793 = vpop.permute.xlu0 %1792
  %v1795 = vmul.f32 %v1777, %v1793
  %1796 = vmatprep.subr.mxu0 0.0
  %1797 = vmatpush1.msra.mxu0 %v42
  %1798 = vmatprep.subr.mxu0 0.0
  %1799 = vmatpush1.msra.mxu0 %v43
  %1800 = vmatprep.subr.mxu0 0.0
  %1801 = vmatpush1.msra.mxu0 %v44
  %1802 = vmatprep.subr.mxu0 0.0
  %1803 = vmatpush1.msra.mxu0 %v45
  %1804 = vmatprep.subr.mxu0 0.0
  %1805 = vmatpush1.msra.mxu0 0.0
  %1806 = vmatprep.subr.mxu0 0.0
  %1807 = vmatpush1.msra.mxu0 0.0
  %1808 = vmatprep.subr.mxu0 0.0
  %1809 = vmatpush1.msra.mxu0 0.0
  %1810 = vmatprep.subr.mxu0 0.0
  %1811 = vmatpush1.msra.mxu0 0.0
  %1812 = vmatprep.subr.mxu0 0.0
  %1813 = vmatpush1.msra.mxu0 0.0
  %1814 = vmatprep.subr.mxu0 0.0
  %1815 = vmatpush1.msra.mxu0 0.0
  %1816 = vmatprep.subr.mxu0 0.0
  %1817 = vmatpush1.msra.mxu0 0.0
  %1818 = vmatprep.subr.mxu0 0.0
  %1819 = vmatpush1.msra.mxu0 0.0
  %1820 = vmatprep.subr.mxu0 0.0
  %1821 = vmatpush1.msra.mxu0 0.0
  %1822 = vmatprep.subr.mxu0 0.0
  %1823 = vmatpush1.msra.mxu0 0.0
  %1824 = vmatprep.subr.mxu0 0.0
  %1825 = vmatpush1.msra.mxu0 0.0
  %1826 = vmatprep.subr.mxu0 0.0
  %1827 = vmatpush1.msra.mxu0 0.0
  %1828 = vmatprep.subr.mxu0 0.0
  %1829 = vmatpush1.msra.mxu0 0.0
  %1830 = vmatprep.subr.mxu0 0.0
  %1831 = vmatpush1.msra.mxu0 0.0
  %1832 = vmatprep.subr.mxu0 0.0
  %1833 = vmatpush1.msra.mxu0 0.0
  %1834 = vmatprep.subr.mxu0 0.0
  %1835 = vmatpush1.msra.mxu0 0.0
  %1836 = vmatprep.subr.mxu0 0.0
  %1837 = vmatpush1.msra.mxu0 0.0
  %1838 = vmatprep.subr.mxu0 0.0
  %1839 = vmatpush1.msra.mxu0 0.0
  %1840 = vmatprep.subr.mxu0 0.0
  %1841 = vmatpush1.msra.mxu0 0.0
  %1842 = vmatprep.subr.mxu0 0.0
  %1843 = vmatpush1.msra.mxu0 0.0
  %1844 = vmatprep.subr.mxu0 0.0
  %1845 = vmatpush1.msra.mxu0 0.0
  %1846 = vmatprep.subr.mxu0 0.0
  %1847 = vmatpush1.msra.mxu0 0.0
  %1848 = vmatprep.subr.mxu0 0.0
  %1849 = vmatpush1.msra.mxu0 0.0
  %1850 = vmatprep.subr.mxu0 0.0
  %1851 = vmatpush1.msra.mxu0 0.0
  %1852 = vmatprep.subr.mxu0 0.0
  %1853 = vmatpush1.msra.mxu0 0.0
  %1854 = vmatprep.subr.mxu0 0.0
  %1855 = vmatpush1.msra.mxu0 0.0
  %1856 = vmatprep.subr.mxu0 0.0
  %1857 = vmatpush1.msra.mxu0 0.0
  %1858 = vmatprep.subr.mxu0 0.0
  %1859 = vmatpush1.msra.mxu0 0.0
  %1860 = vmatprep.mubr.f32.mxu0 0.0
  %1861 = vmatmul.mubr.f32.gmra.mrb[0].mxu0 %v1624
  %v1862 = vpop.f32.mrb[0].mxu0
  %v1863 = vadd.f32 0.0, %v1862
  %v1864 = vpop.f32.mrb[0].mxu0
  %1865 = vdwg.mxu0
  %v1867 = vrot.slane %v1863, 4
  %v1869 = vadd.f32 %v137, %v1867
  %v1870 = vxor.u32 %v1869, 2147483648
  %v1871 = vmul.f32 %v1870, 1.442695
  %v1872 = vpow.pop %v1871
  %v1873 = vadd.f32 %v1872, 1.0
  %v1874 = vrcp.pop %v1873
  %v1875 = vmul.f32 1.0, %v1874
  %v1876 = vtanh.pop %v1869
  %v1878 = vrot.slane %v1613, 6
  %v1880 = vmul.f32 %v1875, %v1878
  %1882 = vrot.lane.b32.xlu0 %v1876, 32
  %v1883 = vpop.permute.xlu0 %1882
  %v1885 = vmul.f32 %v1875, %v1883
  %1887 = vrot.lane.b32.xlu0 %v1885, 32
  %v1888 = vpop.permute.xlu0 %1887
  %v1890 = vadd.f32 %v1880, %v1888
  %v1891 = vtanh.pop %v1890
  %1893 = vrot.lane.b32.xlu0 %v1891, 32
  %v1894 = vpop.permute.xlu0 %1893
  %v1896 = vmul.f32 %v1875, %v1894
  %v1898 = vrot.slane %v1896, 4
  %1899 = vrot.lane.b32.xlu0 %v1898, 64
  %v1900 = vpop.permute.xlu0 %1899
  %v1901 = vsel %vm140, %v1900, 0
  %1903 = vmatprep.subr.mxu0 0.0
  %1904 = vmatpush1.msra.mxu0 %v38
  %1905 = vmatprep.subr.mxu0 0.0
  %1906 = vmatpush1.msra.mxu0 %v39
  %1907 = vmatprep.subr.mxu0 0.0
  %1908 = vmatpush1.msra.mxu0 %v40
  %1909 = vmatprep.subr.mxu0 0.0
  %1910 = vmatpush1.msra.mxu0 %v41
  %1911 = vmatprep.subr.mxu0 0.0
  %1912 = vmatpush1.msra.mxu0 0.0
  %1913 = vmatprep.subr.mxu0 0.0
  %1914 = vmatpush1.msra.mxu0 0.0
  %1915 = vmatprep.subr.mxu0 0.0
  %1916 = vmatpush1.msra.mxu0 0.0
  %1917 = vmatprep.subr.mxu0 0.0
  %1918 = vmatpush1.msra.mxu0 0.0
  %1919 = vmatprep.subr.mxu0 0.0
  %1920 = vmatpush1.msra.mxu0 0.0
  %1921 = vmatprep.subr.mxu0 0.0
  %1922 = vmatpush1.msra.mxu0 0.0
  %1923 = vmatprep.subr.mxu0 0.0
  %1924 = vmatpush1.msra.mxu0 0.0
  %1925 = vmatprep.subr.mxu0 0.0
  %1926 = vmatpush1.msra.mxu0 0.0
  %1927 = vmatprep.subr.mxu0 0.0
  %1928 = vmatpush1.msra.mxu0 0.0
  %1929 = vmatprep.subr.mxu0 0.0
  %1930 = vmatpush1.msra.mxu0 0.0
  %1931 = vmatprep.subr.mxu0 0.0
  %1932 = vmatpush1.msra.mxu0 0.0
  %1933 = vmatprep.subr.mxu0 0.0
  %1934 = vmatpush1.msra.mxu0 0.0
  %1935 = vmatprep.subr.mxu0 0.0
  %1936 = vmatpush1.msra.mxu0 0.0
  %1937 = vmatprep.subr.mxu0 0.0
  %1938 = vmatpush1.msra.mxu0 0.0
  %1939 = vmatprep.subr.mxu0 0.0
  %1940 = vmatpush1.msra.mxu0 0.0
  %1941 = vmatprep.subr.mxu0 0.0
  %1942 = vmatpush1.msra.mxu0 0.0
  %1943 = vmatprep.subr.mxu0 0.0
  %1944 = vmatpush1.msra.mxu0 0.0
  %1945 = vmatprep.subr.mxu0 0.0
  %1946 = vmatpush1.msra.mxu0 0.0
  %1947 = vmatprep.subr.mxu0 0.0
  %1948 = vmatpush1.msra.mxu0 0.0
  %1949 = vmatprep.subr.mxu0 0.0
  %1950 = vmatpush1.msra.mxu0 0.0
  %1951 = vmatprep.subr.mxu0 0.0
  %1952 = vmatpush1.msra.mxu0 0.0
  %1953 = vmatprep.subr.mxu0 0.0
  %1954 = vmatpush1.msra.mxu0 0.0
  %1955 = vmatprep.subr.mxu0 0.0
  %1956 = vmatpush1.msra.mxu0 0.0
  %1957 = vmatprep.subr.mxu0 0.0
  %1958 = vmatpush1.msra.mxu0 0.0
  %1959 = vmatprep.subr.mxu0 0.0
  %1960 = vmatpush1.msra.mxu0 0.0
  %1961 = vmatprep.subr.mxu0 0.0
  %1962 = vmatpush1.msra.mxu0 0.0
  %1963 = vmatprep.subr.mxu0 0.0
  %1964 = vmatpush1.msra.mxu0 0.0
  %1965 = vmatprep.subr.mxu0 0.0
  %1966 = vmatpush1.msra.mxu0 0.0
  %1967 = vmatprep.mubr.f32.mxu0 0.0
  %1968 = vmatmul.mubr.f32.gmra.mrb[0].mxu0 %v1901
  %v1969 = vpop.f32.mrb[0].mxu0
  %v1970 = vadd.f32 %v243, %v1969
  %v1971 = vpop.f32.mrb[0].mxu0
  %1972 = vdwg.mxu0
  %1974 = vrot.lane.b32.xlu0 %v1795, 64
  %v1975 = vpop.permute.xlu0 %1974
  %v1976 = vsel %vm140, %v1975, 0
  %1978 = vmatprep.subr.mxu0 0.0
  %1979 = vmatpush1.msra.mxu0 %v46
  %1980 = vmatprep.subr.mxu0 0.0
  %1981 = vmatpush1.msra.mxu0 %v47
  %1982 = vmatprep.subr.mxu0 0.0
  %1983 = vmatpush1.msra.mxu0 %v48
  %1984 = vmatprep.subr.mxu0 0.0
  %1985 = vmatpush1.msra.mxu0 %v49
  %1986 = vmatprep.subr.mxu0 0.0
  %1987 = vmatpush1.msra.mxu0 0.0
  %1988 = vmatprep.subr.mxu0 0.0
  %1989 = vmatpush1.msra.mxu0 0.0
  %1990 = vmatprep.subr.mxu0 0.0
  %1991 = vmatpush1.msra.mxu0 0.0
  %1992 = vmatprep.subr.mxu0 0.0
  %1993 = vmatpush1.msra.mxu0 0.0
  %1994 = vmatprep.subr.mxu0 0.0
  %1995 = vmatpush1.msra.mxu0 0.0
  %1996 = vmatprep.subr.mxu0 0.0
  %1997 = vmatpush1.msra.mxu0 0.0
  %1998 = vmatprep.subr.mxu0 0.0
  %1999 = vmatpush1.msra.mxu0 0.0
  %2000 = vmatprep.subr.mxu0 0.0
  %2001 = vmatpush1.msra.mxu0 0.0
  %2002 = vmatprep.subr.mxu0 0.0
  %2003 = vmatpush1.msra.mxu0 0.0
  %2004 = vmatprep.subr.mxu0 0.0
  %2005 = vmatpush1.msra.mxu0 0.0
  %2006 = vmatprep.subr.mxu0 0.0
  %2007 = vmatpush1.msra.mxu0 0.0
  %2008 = vmatprep.subr.mxu0 0.0
  %2009 = vmatpush1.msra.mxu0 0.0
  %2010 = vmatprep.subr.mxu0 0.0
  %2011 = vmatpush1.msra.mxu0 0.0
  %2012 = vmatprep.subr.mxu0 0.0
  %2013 = vmatpush1.msra.mxu0 0.0
  %2014 = vmatprep.subr.mxu0 0.0
  %2015 = vmatpush1.msra.mxu0 0.0
  %2016 = vmatprep.subr.mxu0 0.0
  %2017 = vmatpush1.msra.mxu0 0.0
  %2018 = vmatprep.subr.mxu0 0.0
  %2019 = vmatpush1.msra.mxu0 0.0
  %2020 = vmatprep.subr.mxu0 0.0
  %2021 = vmatpush1.msra.mxu0 0.0
  %2022 = vmatprep.subr.mxu0 0.0
  %2023 = vmatpush1.msra.mxu0 0.0
  %2024 = vmatprep.subr.mxu0 0.0
  %2025 = vmatpush1.msra.mxu0 0.0
  %2026 = vmatprep.subr.mxu0 0.0
  %2027 = vmatpush1.msra.mxu0 0.0
  %2028 = vmatprep.subr.mxu0 0.0
  %2029 = vmatpush1.msra.mxu0 0.0
  %2030 = vmatprep.subr.mxu0 0.0
  %2031 = vmatpush1.msra.mxu0 0.0
  %2032 = vmatprep.subr.mxu0 0.0
  %2033 = vmatpush1.msra.mxu0 0.0
  %2034 = vmatprep.subr.mxu0 0.0
  %2035 = vmatpush1.msra.mxu0 0.0
  %2036 = vmatprep.subr.mxu0 0.0
  %2037 = vmatpush1.msra.mxu0 0.0
  %2038 = vmatprep.subr.mxu0 0.0
  %2039 = vmatpush1.msra.mxu0 0.0
  %2040 = vmatprep.subr.mxu0 0.0
  %2041 = vmatpush1.msra.mxu0 0.0
  %2042 = vmatprep.mubr.f32.mxu0 0.0
  %2043 = vmatmul.mubr.f32.gmra.mrb[0].mxu0 %v1976
  %v2044 = vpop.f32.mrb[0].mxu0
  %v2045 = vadd.f32 0.0, %v2044
  %v2046 = vpop.f32.mrb[0].mxu0
  %2047 = vdwg.mxu0
  %v2048 = vadd.f32 %v1970, %v2045
  %v2049 = vxor.u32 %v2048, 2147483648
  %v2050 = vmul.f32 %v2049, 1.442695
  %v2051 = vpow.pop %v2050
  %v2052 = vadd.f32 %v2051, 1.0
  %v2053 = vrcp.pop %v2052
  %v2054 = vmul.f32 1.0, %v2053
  %v2055 = vtanh.pop %v2048
  %v2056 = vmul.f32 %v2054, %v1789
  %2058 = vrot.lane.b32.xlu0 %v2055, 32
  %v2059 = vpop.permute.xlu0 %2058
  %v2061 = vmul.f32 %v2054, %v2059
  %2063 = vrot.lane.b32.xlu0 %v2061, 32
  %v2064 = vpop.permute.xlu0 %2063
  %v2066 = vadd.f32 %v2056, %v2064
  %v2067 = vtanh.pop %v2066
  %2069 = vrot.lane.b32.xlu0 %v2067, 32
  %v2070 = vpop.permute.xlu0 %2069
  %v2072 = vmul.f32 %v2054, %v2070
  %2073 = vmatprep.subr.mxu0 0.0
  %2074 = vmatpush1.msra.mxu0 %v42
  %2075 = vmatprep.subr.mxu0 0.0
  %2076 = vmatpush1.msra.mxu0 %v43
  %2077 = vmatprep.subr.mxu0 0.0
  %2078 = vmatpush1.msra.mxu0 %v44
  %2079 = vmatprep.subr.mxu0 0.0
  %2080 = vmatpush1.msra.mxu0 %v45
  %2081 = vmatprep.subr.mxu0 0.0
  %2082 = vmatpush1.msra.mxu0 0.0
  %2083 = vmatprep.subr.mxu0 0.0
  %2084 = vmatpush1.msra.mxu0 0.0
  %2085 = vmatprep.subr.mxu0 0.0
  %2086 = vmatpush1.msra.mxu0 0.0
  %2087 = vmatprep.subr.mxu0 0.0
  %2088 = vmatpush1.msra.mxu0 0.0
  %2089 = vmatprep.subr.mxu0 0.0
  %2090 = vmatpush1.msra.mxu0 0.0
  %2091 = vmatprep.subr.mxu0 0.0
  %2092 = vmatpush1.msra.mxu0 0.0
  %2093 = vmatprep.subr.mxu0 0.0
  %2094 = vmatpush1.msra.mxu0 0.0
  %2095 = vmatprep.subr.mxu0 0.0
  %2096 = vmatpush1.msra.mxu0 0.0
  %2097 = vmatprep.subr.mxu0 0.0
  %2098 = vmatpush1.msra.mxu0 0.0
  %2099 = vmatprep.subr.mxu0 0.0
  %2100 = vmatpush1.msra.mxu0 0.0
  %2101 = vmatprep.subr.mxu0 0.0
  %2102 = vmatpush1.msra.mxu0 0.0
  %2103 = vmatprep.subr.mxu0 0.0
  %2104 = vmatpush1.msra.mxu0 0.0
  %2105 = vmatprep.subr.mxu0 0.0
  %2106 = vmatpush1.msra.mxu0 0.0
  %2107 = vmatprep.subr.mxu0 0.0
  %2108 = vmatpush1.msra.mxu0 0.0
  %2109 = vmatprep.subr.mxu0 0.0
  %2110 = vmatpush1.msra.mxu0 0.0
  %2111 = vmatprep.subr.mxu0 0.0
  %2112 = vmatpush1.msra.mxu0 0.0
  %2113 = vmatprep.subr.mxu0 0.0
  %2114 = vmatpush1.msra.mxu0 0.0
  %2115 = vmatprep.subr.mxu0 0.0
  %2116 = vmatpush1.msra.mxu0 0.0
  %2117 = vmatprep.subr.mxu0 0.0
  %2118 = vmatpush1.msra.mxu0 0.0
  %2119 = vmatprep.subr.mxu0 0.0
  %2120 = vmatpush1.msra.mxu0 0.0
  %2121 = vmatprep.subr.mxu0 0.0
  %2122 = vmatpush1.msra.mxu0 0.0
  %2123 = vmatprep.subr.mxu0 0.0
  %2124 = vmatpush1.msra.mxu0 0.0
  %2125 = vmatprep.subr.mxu0 0.0
  %2126 = vmatpush1.msra.mxu0 0.0
  %2127 = vmatprep.subr.mxu0 0.0
  %2128 = vmatpush1.msra.mxu0 0.0
  %2129 = vmatprep.subr.mxu0 0.0
  %2130 = vmatpush1.msra.mxu0 0.0
  %2131 = vmatprep.subr.mxu0 0.0
  %2132 = vmatpush1.msra.mxu0 0.0
  %2133 = vmatprep.subr.mxu0 0.0
  %2134 = vmatpush1.msra.mxu0 0.0
  %2135 = vmatprep.subr.mxu0 0.0
  %2136 = vmatpush1.msra.mxu0 0.0
  %2137 = vmatprep.mubr.f32.mxu0 0.0
  %2138 = vmatmul.mubr.f32.gmra.mrb[0].mxu0 %v1901
  %v2139 = vpop.f32.mrb[0].mxu0
  %v2140 = vadd.f32 0.0, %v2139
  %v2141 = vpop.f32.mrb[0].mxu0
  %2142 = vdwg.mxu0
  %v2144 = vrot.slane %v2140, 2
  %v2146 = vadd.f32 %v137, %v2144
  %v2147 = vxor.u32 %v2146, 2147483648
  %v2148 = vmul.f32 %v2147, 1.442695
  %v2149 = vpow.pop %v2148
  %v2150 = vadd.f32 %v2149, 1.0
  %v2151 = vrcp.pop %v2150
  %v2152 = vmul.f32 1.0, %v2151
  %v2153 = vtanh.pop %v2146
  %v2155 = vrot.slane %v1890, 6
  %v2157 = vmul.f32 %v2152, %v2155
  %2159 = vrot.lane.b32.xlu0 %v2153, 32
  %v2160 = vpop.permute.xlu0 %2159
  %v2162 = vmul.f32 %v2152, %v2160
  %2164 = vrot.lane.b32.xlu0 %v2162, 32
  %v2165 = vpop.permute.xlu0 %2164
  %v2167 = vadd.f32 %v2157, %v2165
  %v2168 = vtanh.pop %v2167
  %2170 = vrot.lane.b32.xlu0 %v2168, 32
  %v2171 = vpop.permute.xlu0 %2170
  %v2173 = vmul.f32 %v2152, %v2171
  %v2175 = vrot.slane %v2173, 6
  %2176 = vrot.lane.b32.xlu0 %v2175, 64
  %v2177 = vpop.permute.xlu0 %2176
  %v2178 = vsel %vm140, %v2177, 0
  %2180 = vmatprep.subr.mxu0 0.0
  %2181 = vmatpush1.msra.mxu0 %v38
  %2182 = vmatprep.subr.mxu0 0.0
  %2183 = vmatpush1.msra.mxu0 %v39
  %2184 = vmatprep.subr.mxu0 0.0
  %2185 = vmatpush1.msra.mxu0 %v40
  %2186 = vmatprep.subr.mxu0 0.0
  %2187 = vmatpush1.msra.mxu0 %v41
  %2188 = vmatprep.subr.mxu0 0.0
  %2189 = vmatpush1.msra.mxu0 0.0
  %2190 = vmatprep.subr.mxu0 0.0
  %2191 = vmatpush1.msra.mxu0 0.0
  %2192 = vmatprep.subr.mxu0 0.0
  %2193 = vmatpush1.msra.mxu0 0.0
  %2194 = vmatprep.subr.mxu0 0.0
  %2195 = vmatpush1.msra.mxu0 0.0
  %2196 = vmatprep.subr.mxu0 0.0
  %2197 = vmatpush1.msra.mxu0 0.0
  %2198 = vmatprep.subr.mxu0 0.0
  %2199 = vmatpush1.msra.mxu0 0.0
  %2200 = vmatprep.subr.mxu0 0.0
  %2201 = vmatpush1.msra.mxu0 0.0
  %2202 = vmatprep.subr.mxu0 0.0
  %2203 = vmatpush1.msra.mxu0 0.0
  %2204 = vmatprep.subr.mxu0 0.0
  %2205 = vmatpush1.msra.mxu0 0.0
  %2206 = vmatprep.subr.mxu0 0.0
  %2207 = vmatpush1.msra.mxu0 0.0
  %2208 = vmatprep.subr.mxu0 0.0
  %2209 = vmatpush1.msra.mxu0 0.0
  %2210 = vmatprep.subr.mxu0 0.0
  %2211 = vmatpush1.msra.mxu0 0.0
  %2212 = vmatprep.subr.mxu0 0.0
  %2213 = vmatpush1.msra.mxu0 0.0
  %2214 = vmatprep.subr.mxu0 0.0
  %2215 = vmatpush1.msra.mxu0 0.0
  %2216 = vmatprep.subr.mxu0 0.0
  %2217 = vmatpush1.msra.mxu0 0.0
  %2218 = vmatprep.subr.mxu0 0.0
  %2219 = vmatpush1.msra.mxu0 0.0
  %2220 = vmatprep.subr.mxu0 0.0
  %2221 = vmatpush1.msra.mxu0 0.0
  %2222 = vmatprep.subr.mxu0 0.0
  %2223 = vmatpush1.msra.mxu0 0.0
  %2224 = vmatprep.subr.mxu0 0.0
  %2225 = vmatpush1.msra.mxu0 0.0
  %2226 = vmatprep.subr.mxu0 0.0
  %2227 = vmatpush1.msra.mxu0 0.0
  %2228 = vmatprep.subr.mxu0 0.0
  %2229 = vmatpush1.msra.mxu0 0.0
  %2230 = vmatprep.subr.mxu0 0.0
  %2231 = vmatpush1.msra.mxu0 0.0
  %2232 = vmatprep.subr.mxu0 0.0
  %2233 = vmatpush1.msra.mxu0 0.0
  %2234 = vmatprep.subr.mxu0 0.0
  %2235 = vmatpush1.msra.mxu0 0.0
  %2236 = vmatprep.subr.mxu0 0.0
  %2237 = vmatpush1.msra.mxu0 0.0
  %2238 = vmatprep.subr.mxu0 0.0
  %2239 = vmatpush1.msra.mxu0 0.0
  %2240 = vmatprep.subr.mxu0 0.0
  %2241 = vmatpush1.msra.mxu0 0.0
  %2242 = vmatprep.subr.mxu0 0.0
  %2243 = vmatpush1.msra.mxu0 0.0
  %2244 = vmatprep.mubr.f32.mxu0 0.0
  %2245 = vmatmul.mubr.f32.gmra.mrb[0].mxu0 %v2178
  %v2246 = vpop.f32.mrb[0].mxu0
  %v2247 = vadd.f32 %v243, %v2246
  %v2248 = vpop.f32.mrb[0].mxu0
  %2249 = vdwg.mxu0
  %2251 = vrot.lane.b32.xlu0 %v2072, 64
  %v2252 = vpop.permute.xlu0 %2251
  %v2253 = vsel %vm140, %v2252, 0
  %2255 = vmatprep.subr.mxu0 0.0
  %2256 = vmatpush1.msra.mxu0 %v46
  %2257 = vmatprep.subr.mxu0 0.0
  %2258 = vmatpush1.msra.mxu0 %v47
  %2259 = vmatprep.subr.mxu0 0.0
  %2260 = vmatpush1.msra.mxu0 %v48
  %2261 = vmatprep.subr.mxu0 0.0
  %2262 = vmatpush1.msra.mxu0 %v49
  %2263 = vmatprep.subr.mxu0 0.0
  %2264 = vmatpush1.msra.mxu0 0.0
  %2265 = vmatprep.subr.mxu0 0.0
  %2266 = vmatpush1.msra.mxu0 0.0
  %2267 = vmatprep.subr.mxu0 0.0
  %2268 = vmatpush1.msra.mxu0 0.0
  %2269 = vmatprep.subr.mxu0 0.0
  %2270 = vmatpush1.msra.mxu0 0.0
  %2271 = vmatprep.subr.mxu0 0.0
  %2272 = vmatpush1.msra.mxu0 0.0
  %2273 = vmatprep.subr.mxu0 0.0
  %2274 = vmatpush1.msra.mxu0 0.0
  %2275 = vmatprep.subr.mxu0 0.0
  %2276 = vmatpush1.msra.mxu0 0.0
  %2277 = vmatprep.subr.mxu0 0.0
  %2278 = vmatpush1.msra.mxu0 0.0
  %2279 = vmatprep.subr.mxu0 0.0
  %2280 = vmatpush1.msra.mxu0 0.0
  %2281 = vmatprep.subr.mxu0 0.0
  %2282 = vmatpush1.msra.mxu0 0.0
  %2283 = vmatprep.subr.mxu0 0.0
  %2284 = vmatpush1.msra.mxu0 0.0
  %2285 = vmatprep.subr.mxu0 0.0
  %2286 = vmatpush1.msra.mxu0 0.0
  %2287 = vmatprep.subr.mxu0 0.0
  %2288 = vmatpush1.msra.mxu0 0.0
  %2289 = vmatprep.subr.mxu0 0.0
  %2290 = vmatpush1.msra.mxu0 0.0
  %2291 = vmatprep.subr.mxu0 0.0
  %2292 = vmatpush1.msra.mxu0 0.0
  %2293 = vmatprep.subr.mxu0 0.0
  %2294 = vmatpush1.msra.mxu0 0.0
  %2295 = vmatprep.subr.mxu0 0.0
  %2296 = vmatpush1.msra.mxu0 0.0
  %2297 = vmatprep.subr.mxu0 0.0
  %2298 = vmatpush1.msra.mxu0 0.0
  %2299 = vmatprep.subr.mxu0 0.0
  %2300 = vmatpush1.msra.mxu0 0.0
  %2301 = vmatprep.subr.mxu0 0.0
  %2302 = vmatpush1.msra.mxu0 0.0
  %2303 = vmatprep.subr.mxu0 0.0
  %2304 = vmatpush1.msra.mxu0 0.0
  %2305 = vmatprep.subr.mxu0 0.0
  %2306 = vmatpush1.msra.mxu0 0.0
  %2307 = vmatprep.subr.mxu0 0.0
  %2308 = vmatpush1.msra.mxu0 0.0
  %2309 = vmatprep.subr.mxu0 0.0
  %2310 = vmatpush1.msra.mxu0 0.0
  %2311 = vmatprep.subr.mxu0 0.0
  %2312 = vmatpush1.msra.mxu0 0.0
  %2313 = vmatprep.subr.mxu0 0.0
  %2314 = vmatpush1.msra.mxu0 0.0
  %2315 = vmatprep.subr.mxu0 0.0
  %2316 = vmatpush1.msra.mxu0 0.0
  %2317 = vmatprep.subr.mxu0 0.0
  %2318 = vmatpush1.msra.mxu0 0.0
  %2319 = vmatprep.mubr.f32.mxu0 0.0
  %2320 = vmatmul.mubr.f32.gmra.mrb[0].mxu0 %v2253
  %v2321 = vpop.f32.mrb[0].mxu0
  %v2322 = vadd.f32 0.0, %v2321
  %v2323 = vpop.f32.mrb[0].mxu0
  %2324 = vdwg.mxu0
  %v2325 = vadd.f32 %v2247, %v2322
  %v2326 = vxor.u32 %v2325, 2147483648
  %v2327 = vmul.f32 %v2326, 1.442695
  %v2328 = vpow.pop %v2327
  %v2329 = vadd.f32 %v2328, 1.0
  %v2330 = vrcp.pop %v2329
  %v2331 = vmul.f32 1.0, %v2330
  %v2332 = vtanh.pop %v2325
  %v2333 = vmul.f32 %v2331, %v2066
  %2335 = vrot.lane.b32.xlu0 %v2332, 32
  %v2336 = vpop.permute.xlu0 %2335
  %v2338 = vmul.f32 %v2331, %v2336
  %2340 = vrot.lane.b32.xlu0 %v2338, 32
  %v2341 = vpop.permute.xlu0 %2340
  %v2343 = vadd.f32 %v2333, %v2341
  %v2344 = vtanh.pop %v2343
  %2346 = vrot.lane.b32.xlu0 %v2344, 32
  %v2347 = vpop.permute.xlu0 %2346
  %v2349 = vmul.f32 %v2331, %v2347
  %v2350 = vld [vmem:[%s7] sm:$0xff]
  %v2351 = vld [vmem:[%s7 + $0x8] sm:$0xff]
  %v2352 = vld [vmem:[%s7 + $0x10] sm:$0xff]
  %v2353 = vld [vmem:[%s7 + $0x18] sm:$0xff]
  %v2354 = vld [vmem:[#allocation2] sm:$0x1]
  %v2356 = vlaneseq
  %v2357 = vshrl.u32 %v2356, 7
  %v2358 = vsub.s32 0, %v2357
  %v2359 = vrot.slane %v2354, %v2358
  %2362 = vrot.lane.b32.xlu0 %v2349, 64
  %v2363 = vpop.permute.xlu0 %2362
  %v2364 = vsel %vm140, %v2363, 0
  %2366 = vmatprep.subr.mxu0 0.0
  %2367 = vmatpush1.msra.mxu0 %v2350
  %2368 = vmatprep.subr.mxu0 0.0
  %2369 = vmatpush1.msra.mxu0 %v2351
  %2370 = vmatprep.subr.mxu0 0.0
  %2371 = vmatpush1.msra.mxu0 %v2352
  %2372 = vmatprep.subr.mxu0 0.0
  %2373 = vmatpush1.msra.mxu0 %v2353
  %2374 = vmatprep.subr.mxu0 0.0
  %2375 = vmatpush1.msra.mxu0 0.0
  %2376 = vmatprep.subr.mxu0 0.0
  %2377 = vmatpush1.msra.mxu0 0.0
  %2378 = vmatprep.subr.mxu0 0.0
  %2379 = vmatpush1.msra.mxu0 0.0
  %2380 = vmatprep.subr.mxu0 0.0
  %2381 = vmatpush1.msra.mxu0 0.0
  %2382 = vmatprep.subr.mxu0 0.0
  %2383 = vmatpush1.msra.mxu0 0.0
  %2384 = vmatprep.subr.mxu0 0.0
  %2385 = vmatpush1.msra.mxu0 0.0
  %2386 = vmatprep.subr.mxu0 0.0
  %2387 = vmatpush1.msra.mxu0 0.0
  %2388 = vmatprep.subr.mxu0 0.0
  %2389 = vmatpush1.msra.mxu0 0.0
  %2390 = vmatprep.subr.mxu0 0.0
  %2391 = vmatpush1.msra.mxu0 0.0
  %2392 = vmatprep.subr.mxu0 0.0
  %2393 = vmatpush1.msra.mxu0 0.0
  %2394 = vmatprep.subr.mxu0 0.0
  %2395 = vmatpush1.msra.mxu0 0.0
  %2396 = vmatprep.subr.mxu0 0.0
  %2397 = vmatpush1.msra.mxu0 0.0
  %2398 = vmatprep.subr.mxu0 0.0
  %2399 = vmatpush1.msra.mxu0 0.0
  %2400 = vmatprep.subr.mxu0 0.0
  %2401 = vmatpush1.msra.mxu0 0.0
  %2402 = vmatprep.subr.mxu0 0.0
  %2403 = vmatpush1.msra.mxu0 0.0
  %2404 = vmatprep.subr.mxu0 0.0
  %2405 = vmatpush1.msra.mxu0 0.0
  %2406 = vmatprep.subr.mxu0 0.0
  %2407 = vmatpush1.msra.mxu0 0.0
  %2408 = vmatprep.subr.mxu0 0.0
  %2409 = vmatpush1.msra.mxu0 0.0
  %2410 = vmatprep.subr.mxu0 0.0
  %2411 = vmatpush1.msra.mxu0 0.0
  %2412 = vmatprep.subr.mxu0 0.0
  %2413 = vmatpush1.msra.mxu0 0.0
  %2414 = vmatprep.subr.mxu0 0.0
  %2415 = vmatpush1.msra.mxu0 0.0
  %2416 = vmatprep.subr.mxu0 0.0
  %2417 = vmatpush1.msra.mxu0 0.0
  %2418 = vmatprep.subr.mxu0 0.0
  %2419 = vmatpush1.msra.mxu0 0.0
  %2420 = vmatprep.subr.mxu0 0.0
  %2421 = vmatpush1.msra.mxu0 0.0
  %2422 = vmatprep.subr.mxu0 0.0
  %2423 = vmatpush1.msra.mxu0 0.0
  %2424 = vmatprep.subr.mxu0 0.0
  %2425 = vmatpush1.msra.mxu0 0.0
  %2426 = vmatprep.subr.mxu0 0.0
  %2427 = vmatpush1.msra.mxu0 0.0
  %2428 = vmatprep.subr.mxu0 0.0
  %2429 = vmatpush1.msra.mxu0 0.0
  %2430 = vmatprep.mubr.f32.mxu0 0.0
  %2431 = vmatmul.mubr.f32.gmra.mrb[0].mxu0 %v2364
  %v2432 = vpop.f32.mrb[0].mxu0
  %v2433 = vadd.f32 %v2359, %v2432
  %v2434 = vpop.f32.mrb[0].mxu0
  %2435 = vdwg.mxu0
  %vm2436 = vcmask 1024
  %2437 = vst.msk [vmem:[%s9] sm:$0x3] %vm2436, %v2433
  // Predicated region
  $region38: #{lstm_model.1} parent=0 // pred_check
    _
  $region39: #{lstm_model.1} parent=0 // pred_check_branch
    %2439 = sbr.rel (0) target = $region41
  $region40: #{lstm_model.1} parent=0 // pred_region
    _
  $region41: #{lstm_model.1} parent=0 // pred_fallthru
    _
  // Predicated region
  $region42: #{lstm_model.1} parent=0 // pred_check
    _
  $region43: #{lstm_model.1} parent=0 // pred_check_branch
    %2441 = sbr.rel (0) target = $region45
  $region44: #{lstm_model.1} parent=0 // pred_region
    _
  $region45: #{lstm_model.1} parent=0 // pred_fallthru
    _

</llo_original>
